<compile_context>
chip_gen: v6e
topology: v6e:2x2x1
jax: 0.10.0
libtpu: 0.0.40
codegen_flags: <defaults>
</compile_context>

<pallas_src>
import math

import jax
import jax.numpy as jnp
from jax import lax
from jax.experimental import pallas as pl
from jax.experimental.pallas import tpu as pltpu

KH = KW = 3          # fixed 3x3 kernels, as in the PyTorch module
NTAP = KH * KW       # 9
SLOT = 8             # sublane-aligned rows reserved per tap in the im2col buffer
KPACK = NTAP * SLOT  # 72 = packed contraction dimension


def _round_up(v, m):
    return (v + m - 1) // m * m


def _pick_nb(n, h, w):
    """Images per grid step: largest divisor of n (<=8) keeping lane widths legal."""
    divisors = [d for d in range(1, n + 1) if n % d == 0]
    ok = [d for d in divisors if d == n or (d * h * w) % 128 == 0]
    small = [d for d in ok if d <= 8]
    return max(small) if small else min(ok)


def _pack_weight(w_taps):
    """(9, Cout, Cin) tap weights -> (Cout, 72) packed matrix.

    Column t*8 + c holds w_taps[t, :, c]; columns with c >= Cin are zero so they
    annihilate whatever finite data sits in the matching im2col rows.
    """
    _, cout, cin = w_taps.shape
    w_t = jnp.transpose(w_taps, (1, 0, 2))                       # (Cout, 9, Cin)
    w_p = jnp.pad(w_t, ((0, 0), (0, 0), (0, SLOT - cin)))        # (Cout, 9, 8)
    return w_p.reshape(cout, KPACK).astype(jnp.float32)          # (Cout, 72)


def _make_kernel(H, W, Cin, C, M0, Mpad):
    """Build the kernel closure (static shapes captured)."""

    def kernel(x_ref, w1_ref, b1_ref, w2_ref, b2_ref, w3_ref, b3_ref,
               sel_ref, out_ref, p0, p1, p2, im):
        # Stage the input with a zero halo; zero the im2col buffer so the
        # unused slot rows of the Cin=3 layer (and halo-sourced columns) are
        # finite and contribute exact zeros through the zero weight columns.
        p0[:, :M0] = x_ref[0]
        p0[:, M0:Mpad] = jnp.zeros((Cin, Mpad - M0), jnp.float32)
        p1[:, M0:Mpad] = jnp.zeros((C, Mpad - M0), jnp.float32)
        p2[:, M0:Mpad] = jnp.zeros((C, Mpad - M0), jnp.float32)
        im[...] = jnp.zeros_like(im)

        def im2col(src_ref, cin_l):
            # 9 statically-shifted whole-plane copies into sublane-aligned slots.
            for t in range(NTAP):
                dy, dx = divmod(t, KW)
                s = dy * W + dx                       # static lane shift
                im[t * SLOT: t * SLOT + cin_l, :] = src_ref[:, s:s + M0]

        def conv_relu(w_ref, b_ref):
            # One whole-plane MXU contraction per layer, f32 accumulation.
            acc = jnp.dot(w_ref[...], im[...], preferred_element_type=jnp.float32)
            # bias + ReLU applied once on the whole plane
            return jnp.maximum(acc + b_ref[...], 0.0)

        im2col(p0, Cin)
        p1[:, :M0] = conv_relu(w1_ref, b1_ref)        # conv1 + ReLU
        im2col(p1, C)
        p2[:, :M0] = conv_relu(w2_ref, b2_ref)        # conv2 + ReLU
        im2col(p2, C)
        h3 = conv_relu(w3_ref, b3_ref)                # conv3 + ReLU (kept as value)

        # Masked per-image spatial mean as a single (C, M0) x (M0, NB) matmul.
        out_ref[0] = jnp.dot(h3, sel_ref[...], preferred_element_type=jnp.float32)

    return kernel


def side_information_network(x_nchw, params):
    """params = (w1, b1, w2, b2, w3, b3); weights as taps (9, Cout, Cin), biases (Cout, 1)."""
    w1, b1, w2, b2, w3, b3 = params
    x = x_nchw.astype(jnp.float32)
    N, Cin, H, W = x.shape
    C = w1.shape[1]
    H3, W3 = H - 6, W - 6
    assert H3 >= 1 and W3 >= 1, "need spatial extent > 6 for three valid 3x3 convs"

    NB = _pick_nb(N, H, W)
    G = N // NB
    HW = H * W
    M0 = NB * HW                                   # flattened spatial width per step
    Mpad = _round_up(M0 + 2 * W + 2, 128)          # halo for the largest tap shift

    # NCHW -> per-grid-step channel-major flattened planes: (G, Cin, NB*H*W)
    xg = x.reshape(G, NB, Cin, HW).transpose(0, 2, 1, 3).reshape(G, Cin, M0)

    # Pack tap weights into (Cout, 72) matrices so each conv is one contraction.
    w1p, w2p, w3p = _pack_weight(w1), _pack_weight(w2), _pack_weight(w3)

    # Selection matrix: col j of image n -> 1/(H3*W3) if it is a valid conv3
    # output position, else 0. Turns the masked per-image mean into one matmul.
    cols = jnp.arange(M0)
    img = cols // HW
    rem = cols % HW
    yy = rem // W
    xx = rem % W
    valid = (yy < H3) & (xx < W3)
    sel = jnp.where(valid[:, None] & (img[:, None] == jnp.arange(NB)[None, :]),
                    1.0 / float(H3 * W3), 0.0).astype(jnp.float32)

    kernel = _make_kernel(H, W, Cin, C, M0, Mpad)

    out = pl.pallas_call(
        kernel,
        out_shape=jax.ShapeDtypeStruct((G, C, NB), jnp.float32),
        grid_spec=pltpu.PrefetchScalarGridSpec(
            num_scalar_prefetch=0,
            grid=(G,),
            in_specs=[
                pl.BlockSpec((1, Cin, M0), lambda g: (g, 0, 0)),
                pl.BlockSpec((C, KPACK), lambda g: (0, 0)),
                pl.BlockSpec((C, 1), lambda g: (0, 0)),
                pl.BlockSpec((C, KPACK), lambda g: (0, 0)),
                pl.BlockSpec((C, 1), lambda g: (0, 0)),
                pl.BlockSpec((C, KPACK), lambda g: (0, 0)),
                pl.BlockSpec((C, 1), lambda g: (0, 0)),
                pl.BlockSpec((M0, NB), lambda g: (0, 0)),
            ],
            out_specs=pl.BlockSpec((1, C, NB), lambda g: (g, 0, 0)),
            scratch_shapes=[
                pltpu.VMEM((Cin, Mpad), jnp.float32),   # padded input plane
                pltpu.VMEM((C, Mpad), jnp.float32),     # conv1 output plane
                pltpu.VMEM((C, Mpad), jnp.float32),     # conv2 output plane
                pltpu.VMEM((KPACK, M0), jnp.float32),   # shared im2col buffer
            ],
        ),
        compiler_params=pltpu.CompilerParams(
            dimension_semantics=("parallel",)),
    )(xg, w1p, b1, w2p, b2, w3p, b3, sel)

    # (G, C, NB) -> (N, C)
    return out.transpose(0, 2, 1).reshape(N, C)


def ref_forward(x_nchw, params):
    """Pure-JAX reference matching the PyTorch forward."""
    w1, b1, w2, b2, w3, b3 = params

    def to_oihw(w_taps):
        cout, cin = w_taps.shape[1], w_taps.shape[2]
        return w_taps.reshape(KH, KW, cout, cin).transpose(2, 3, 0, 1)

    def conv(x, w_taps, b):
        y = lax.conv_general_dilated(
            x, to_oihw(w_taps), window_strides=(1, 1), padding="VALID",
            dimension_numbers=("NCHW", "OIHW", "NCHW"))
        return jnp.maximum(y + b.reshape(1, -1, 1, 1), 0.0)

    x = x_nchw.astype(jnp.float32)
    h = conv(conv(conv(x, w1, b1), w2, b2), w3, b3)
    return h.mean((2, 3))


def init_params(key, cin, ccond):
    """Deterministic synthetic init (kaiming-uniform-like bounds); tap layout (9, Cout, Cin)."""
    ks = jax.random.split(key, 6)

    def w_init(k, cout, cin_l):
        bound = 1.0 / math.sqrt(KH * KW * cin_l)
        return jax.random.uniform(k, (KH * KW, cout, cin_l), jnp.float32, -bound, bound)

    def b_init(k, cout, cin_l):
        bound = 1.0 / math.sqrt(KH * KW * cin_l)
        return jax.random.uniform(k, (cout, 1), jnp.float32, -bound, bound)

    return (w_init(ks[0], ccond, cin), b_init(ks[1], ccond, cin),
            w_init(ks[2], ccond, ccond), b_init(ks[3], ccond, ccond),
            w_init(ks[4], ccond, ccond), b_init(ks[5], ccond, ccond))


if __name__ == "__main__":
    key = jax.random.PRNGKey(0)
    kx, kp = jax.random.split(key)

    N, Cin, H, W = 2, 3, 16, 16      # Conv2d(3, Ccond): input channels fixed at 3
    Ccond = 8

    x = jax.random.normal(kx, (N, Cin, H, W), jnp.float32)   # PyTorch NCHW input
    params = init_params(kp, Cin, Ccond)

    out = jax.block_until_ready(side_information_network(x, params))
    ref = jax.block_until_ready(ref_forward(x, params))

    assert out.shape == (N, Ccond)
    assert jnp.allclose(out, ref, atol=1e-4, rtol=1e-4), (out, ref)

    print("KERNEL_OK")
</pallas_src>

<mosaic_0001>
module attributes {stable_mosaic.version = 11 : i64} {
  func.func @kernel(%arg0: i32, %arg1: memref<1x3x512xf32, #tpu.memory_space<vmem>>, %arg2: memref<8x72xf32, #tpu.memory_space<vmem>>, %arg3: memref<8x1xf32, #tpu.memory_space<vmem>>, %arg4: memref<8x72xf32, #tpu.memory_space<vmem>>, %arg5: memref<8x1xf32, #tpu.memory_space<vmem>>, %arg6: memref<8x72xf32, #tpu.memory_space<vmem>>, %arg7: memref<8x1xf32, #tpu.memory_space<vmem>>, %arg8: memref<512x2xf32, #tpu.memory_space<vmem>>, %arg9: memref<1x8x2xf32, #tpu.memory_space<vmem>>, %arg10: memref<3x640xf32, #tpu.memory_space<vmem>>, %arg11: memref<8x640xf32, #tpu.memory_space<vmem>>, %arg12: memref<8x640xf32, #tpu.memory_space<vmem>>, %arg13: memref<72x512xf32, #tpu.memory_space<vmem>>) attributes {dimension_semantics = [#tpu.dimension_semantics<parallel>], iteration_bounds = array<i64: 1>, scalar_prefetch = 0 : i64, scratch_operands = 4 : i64, tpu.core_type = #tpu.core_type<tc>, window_params = [{transform_indices = @transform_0, window_bounds = array<i64: 1, 3, 512>}, {pipeline_mode = #tpu.pipeline_mode<synchronous>, transform_indices = @transform_1, window_bounds = array<i64: 8, 72>}, {pipeline_mode = #tpu.pipeline_mode<synchronous>, transform_indices = @transform_2, window_bounds = array<i64: 8, 1>}, {pipeline_mode = #tpu.pipeline_mode<synchronous>, transform_indices = @transform_3, window_bounds = array<i64: 8, 72>}, {pipeline_mode = #tpu.pipeline_mode<synchronous>, transform_indices = @transform_4, window_bounds = array<i64: 8, 1>}, {pipeline_mode = #tpu.pipeline_mode<synchronous>, transform_indices = @transform_5, window_bounds = array<i64: 8, 72>}, {pipeline_mode = #tpu.pipeline_mode<synchronous>, transform_indices = @transform_6, window_bounds = array<i64: 8, 1>}, {pipeline_mode = #tpu.pipeline_mode<synchronous>, transform_indices = @transform_7, window_bounds = array<i64: 512, 2>}, {transform_indices = @transform_8, window_bounds = array<i64: 1, 8, 2>}]} {
    %c0 = arith.constant 0 : index
    %c0_0 = arith.constant 0 : index
    %c0_1 = arith.constant 0 : index
    %0 = vector.load %arg1[%c0, %c0_0, %c0_1] : memref<1x3x512xf32, #tpu.memory_space<vmem>>, vector<1x3x512xf32>
    %1 = vector.shape_cast %0 : vector<1x3x512xf32> to vector<3x512xf32>
    %c0_2 = arith.constant 0 : index
    %c0_3 = arith.constant 0 : index
    %2 = vector.load %arg10[%c0_2, %c0_3] : memref<3x640xf32, #tpu.memory_space<vmem>>, vector<3x512xf32>
    tpu.vector_store %arg10[%c0_2, %c0_3], %1 {strides = array<i32>} : memref<3x640xf32, #tpu.memory_space<vmem>>, vector<3x512xf32>,
    %cst = arith.constant 0.000000e+00 : f32
    %3 = vector.broadcast %cst : f32 to vector<3x128xf32>
    %c0_4 = arith.constant 0 : index
    %c512 = arith.constant 512 : index
    %4 = vector.load %arg10[%c0_4, %c512] : memref<3x640xf32, #tpu.memory_space<vmem>>, vector<3x128xf32>
    tpu.vector_store %arg10[%c0_4, %c512], %3 {strides = array<i32>} : memref<3x640xf32, #tpu.memory_space<vmem>>, vector<3x128xf32>,
    %cst_5 = arith.constant 0.000000e+00 : f32
    %5 = vector.broadcast %cst_5 : f32 to vector<8x128xf32>
    %c0_6 = arith.constant 0 : index
    %c512_7 = arith.constant 512 : index
    %6 = vector.load %arg11[%c0_6, %c512_7] : memref<8x640xf32, #tpu.memory_space<vmem>>, vector<8x128xf32>
    tpu.vector_store %arg11[%c0_6, %c512_7], %5 {strides = array<i32>} : memref<8x640xf32, #tpu.memory_space<vmem>>, vector<8x128xf32>,
    %cst_8 = arith.constant 0.000000e+00 : f32
    %7 = vector.broadcast %cst_8 : f32 to vector<8x128xf32>
    %c0_9 = arith.constant 0 : index
    %c512_10 = arith.constant 512 : index
    %8 = vector.load %arg12[%c0_9, %c512_10] : memref<8x640xf32, #tpu.memory_space<vmem>>, vector<8x128xf32>
    tpu.vector_store %arg12[%c0_9, %c512_10], %7 {strides = array<i32>} : memref<8x640xf32, #tpu.memory_space<vmem>>, vector<8x128xf32>,
    %cst_11 = arith.constant 0.000000e+00 : f32
    %9 = vector.broadcast %cst_11 : f32 to vector<72x512xf32>
    %c0_12 = arith.constant 0 : index
    %c0_13 = arith.constant 0 : index
    %10 = vector.load %arg13[%c0_12, %c0_13] : memref<72x512xf32, #tpu.memory_space<vmem>>, vector<72x512xf32>
    tpu.vector_store %arg13[%c0_12, %c0_13], %9 {strides = array<i32>} : memref<72x512xf32, #tpu.memory_space<vmem>>, vector<72x512xf32>,
    %c0_14 = arith.constant 0 : index
    %c0_15 = arith.constant 0 : index
    %11 = vector.load %arg10[%c0_14, %c0_15] : memref<3x640xf32, #tpu.memory_space<vmem>>, vector<3x512xf32>
    %c0_16 = arith.constant 0 : index
    %c0_17 = arith.constant 0 : index
    %12 = vector.load %arg13[%c0_16, %c0_17] : memref<72x512xf32, #tpu.memory_space<vmem>>, vector<3x512xf32>
    tpu.vector_store %arg13[%c0_16, %c0_17], %11 {strides = array<i32>} : memref<72x512xf32, #tpu.memory_space<vmem>>, vector<3x512xf32>,
    %c0_18 = arith.constant 0 : index
    %c1 = arith.constant 1 : index
    %13 = vector.load %arg10[%c0_18, %c1] : memref<3x640xf32, #tpu.memory_space<vmem>>, vector<3x512xf32>
    %c8 = arith.constant 8 : index
    %c0_19 = arith.constant 0 : index
    %14 = vector.load %arg13[%c8, %c0_19] : memref<72x512xf32, #tpu.memory_space<vmem>>, vector<3x512xf32>
    tpu.vector_store %arg13[%c8, %c0_19], %13 {strides = array<i32>} : memref<72x512xf32, #tpu.memory_space<vmem>>, vector<3x512xf32>,
    %c0_20 = arith.constant 0 : index
    %c2 = arith.constant 2 : index
    %15 = vector.load %arg10[%c0_20, %c2] : memref<3x640xf32, #tpu.memory_space<vmem>>, vector<3x512xf32>
    %c16 = arith.constant 16 : index
    %c0_21 = arith.constant 0 : index
    %16 = vector.load %arg13[%c16, %c0_21] : memref<72x512xf32, #tpu.memory_space<vmem>>, vector<3x512xf32>
    tpu.vector_store %arg13[%c16, %c0_21], %15 {strides = array<i32>} : memref<72x512xf32, #tpu.memory_space<vmem>>, vector<3x512xf32>,
    %c0_22 = arith.constant 0 : index
    %c16_23 = arith.constant 16 : index
    %17 = vector.load %arg10[%c0_22, %c16_23] : memref<3x640xf32, #tpu.memory_space<vmem>>, vector<3x512xf32>
    %c24 = arith.constant 24 : index
    %c0_24 = arith.constant 0 : index
    %18 = vector.load %arg13[%c24, %c0_24] : memref<72x512xf32, #tpu.memory_space<vmem>>, vector<3x512xf32>
    tpu.vector_store %arg13[%c24, %c0_24], %17 {strides = array<i32>} : memref<72x512xf32, #tpu.memory_space<vmem>>, vector<3x512xf32>,
    %c0_25 = arith.constant 0 : index
    %c17 = arith.constant 17 : index
    %19 = vector.load %arg10[%c0_25, %c17] : memref<3x640xf32, #tpu.memory_space<vmem>>, vector<3x512xf32>
    %c32 = arith.constant 32 : index
    %c0_26 = arith.constant 0 : index
    %20 = vector.load %arg13[%c32, %c0_26] : memref<72x512xf32, #tpu.memory_space<vmem>>, vector<3x512xf32>
    tpu.vector_store %arg13[%c32, %c0_26], %19 {strides = array<i32>} : memref<72x512xf32, #tpu.memory_space<vmem>>, vector<3x512xf32>,
    %c0_27 = arith.constant 0 : index
    %c18 = arith.constant 18 : index
    %21 = vector.load %arg10[%c0_27, %c18] : memref<3x640xf32, #tpu.memory_space<vmem>>, vector<3x512xf32>
    %c40 = arith.constant 40 : index
    %c0_28 = arith.constant 0 : index
    %22 = vector.load %arg13[%c40, %c0_28] : memref<72x512xf32, #tpu.memory_space<vmem>>, vector<3x512xf32>
    tpu.vector_store %arg13[%c40, %c0_28], %21 {strides = array<i32>} : memref<72x512xf32, #tpu.memory_space<vmem>>, vector<3x512xf32>,
    %c0_29 = arith.constant 0 : index
    %c32_30 = arith.constant 32 : index
    %23 = vector.load %arg10[%c0_29, %c32_30] : memref<3x640xf32, #tpu.memory_space<vmem>>, vector<3x512xf32>
    %c48 = arith.constant 48 : index
    %c0_31 = arith.constant 0 : index
    %24 = vector.load %arg13[%c48, %c0_31] : memref<72x512xf32, #tpu.memory_space<vmem>>, vector<3x512xf32>
    tpu.vector_store %arg13[%c48, %c0_31], %23 {strides = array<i32>} : memref<72x512xf32, #tpu.memory_space<vmem>>, vector<3x512xf32>,
    %c0_32 = arith.constant 0 : index
    %c33 = arith.constant 33 : index
    %25 = vector.load %arg10[%c0_32, %c33] : memref<3x640xf32, #tpu.memory_space<vmem>>, vector<3x512xf32>
    %c56 = arith.constant 56 : index
    %c0_33 = arith.constant 0 : index
    %26 = vector.load %arg13[%c56, %c0_33] : memref<72x512xf32, #tpu.memory_space<vmem>>, vector<3x512xf32>
    tpu.vector_store %arg13[%c56, %c0_33], %25 {strides = array<i32>} : memref<72x512xf32, #tpu.memory_space<vmem>>, vector<3x512xf32>,
    %c0_34 = arith.constant 0 : index
    %c34 = arith.constant 34 : index
    %27 = vector.load %arg10[%c0_34, %c34] : memref<3x640xf32, #tpu.memory_space<vmem>>, vector<3x512xf32>
    %c64 = arith.constant 64 : index
    %c0_35 = arith.constant 0 : index
    %28 = vector.load %arg13[%c64, %c0_35] : memref<72x512xf32, #tpu.memory_space<vmem>>, vector<3x512xf32>
    tpu.vector_store %arg13[%c64, %c0_35], %27 {strides = array<i32>} : memref<72x512xf32, #tpu.memory_space<vmem>>, vector<3x512xf32>,
    %c0_36 = arith.constant 0 : index
    %c0_37 = arith.constant 0 : index
    %29 = vector.load %arg2[%c0_36, %c0_37] : memref<8x72xf32, #tpu.memory_space<vmem>>, vector<8x72xf32>
    %c0_38 = arith.constant 0 : index
    %c0_39 = arith.constant 0 : index
    %30 = vector.load %arg13[%c0_38, %c0_39] : memref<72x512xf32, #tpu.memory_space<vmem>>, vector<72x512xf32>
    %cst_40 = arith.constant dense<0.000000e+00> : vector<8x512xf32>
    %31 = tpu.matmul %29, %30, %cst_40 {dimension_numbers = #tpu.dot_dimension_numbers<[1], [0], [0], [1], [0, 0, 1, 1], [], []>} : vector<8x72xf32>, vector<72x512xf32>, vector<8x512xf32> -> vector<8x512xf32>
    %c0_41 = arith.constant 0 : index
    %c0_42 = arith.constant 0 : index
    %32 = vector.load %arg3[%c0_41, %c0_42] : memref<8x1xf32, #tpu.memory_space<vmem>>, vector<8x1xf32>
    %33 = vector.broadcast %32 : vector<8x1xf32> to vector<8x512xf32>
    %34 = arith.addf %31, %33 : vector<8x512xf32>
    %cst_43 = arith.constant 0.000000e+00 : f32
    %35 = vector.broadcast %cst_43 : f32 to vector<8x512xf32>
    %36 = arith.maximumf %34, %35 : vector<8x512xf32>
    %c0_44 = arith.constant 0 : index
    %c0_45 = arith.constant 0 : index
    %37 = vector.load %arg11[%c0_44, %c0_45] : memref<8x640xf32, #tpu.memory_space<vmem>>, vector<8x512xf32>
    tpu.vector_store %arg11[%c0_44, %c0_45], %36 {strides = array<i32>} : memref<8x640xf32, #tpu.memory_space<vmem>>, vector<8x512xf32>,
    %c0_46 = arith.constant 0 : index
    %c0_47 = arith.constant 0 : index
    %38 = vector.load %arg11[%c0_46, %c0_47] : memref<8x640xf32, #tpu.memory_space<vmem>>, vector<8x512xf32>
    %c0_48 = arith.constant 0 : index
    %c0_49 = arith.constant 0 : index
    %39 = vector.load %arg13[%c0_48, %c0_49] : memref<72x512xf32, #tpu.memory_space<vmem>>, vector<8x512xf32>
    tpu.vector_store %arg13[%c0_48, %c0_49], %38 {strides = array<i32>} : memref<72x512xf32, #tpu.memory_space<vmem>>, vector<8x512xf32>,
    %c0_50 = arith.constant 0 : index
    %c1_51 = arith.constant 1 : index
    %40 = vector.load %arg11[%c0_50, %c1_51] : memref<8x640xf32, #tpu.memory_space<vmem>>, vector<8x512xf32>
    %c8_52 = arith.constant 8 : index
    %c0_53 = arith.constant 0 : index
    %41 = vector.load %arg13[%c8_52, %c0_53] : memref<72x512xf32, #tpu.memory_space<vmem>>, vector<8x512xf32>
    tpu.vector_store %arg13[%c8_52, %c0_53], %40 {strides = array<i32>} : memref<72x512xf32, #tpu.memory_space<vmem>>, vector<8x512xf32>,
    %c0_54 = arith.constant 0 : index
    %c2_55 = arith.constant 2 : index
    %42 = vector.load %arg11[%c0_54, %c2_55] : memref<8x640xf32, #tpu.memory_space<vmem>>, vector<8x512xf32>
    %c16_56 = arith.constant 16 : index
    %c0_57 = arith.constant 0 : index
    %43 = vector.load %arg13[%c16_56, %c0_57] : memref<72x512xf32, #tpu.memory_space<vmem>>, vector<8x512xf32>
    tpu.vector_store %arg13[%c16_56, %c0_57], %42 {strides = array<i32>} : memref<72x512xf32, #tpu.memory_space<vmem>>, vector<8x512xf32>,
    %c0_58 = arith.constant 0 : index
    %c16_59 = arith.constant 16 : index
    %44 = vector.load %arg11[%c0_58, %c16_59] : memref<8x640xf32, #tpu.memory_space<vmem>>, vector<8x512xf32>
    %c24_60 = arith.constant 24 : index
    %c0_61 = arith.constant 0 : index
    %45 = vector.load %arg13[%c24_60, %c0_61] : memref<72x512xf32, #tpu.memory_space<vmem>>, vector<8x512xf32>
    tpu.vector_store %arg13[%c24_60, %c0_61], %44 {strides = array<i32>} : memref<72x512xf32, #tpu.memory_space<vmem>>, vector<8x512xf32>,
    %c0_62 = arith.constant 0 : index
    %c17_63 = arith.constant 17 : index
    %46 = vector.load %arg11[%c0_62, %c17_63] : memref<8x640xf32, #tpu.memory_space<vmem>>, vector<8x512xf32>
    %c32_64 = arith.constant 32 : index
    %c0_65 = arith.constant 0 : index
    %47 = vector.load %arg13[%c32_64, %c0_65] : memref<72x512xf32, #tpu.memory_space<vmem>>, vector<8x512xf32>
    tpu.vector_store %arg13[%c32_64, %c0_65], %46 {strides = array<i32>} : memref<72x512xf32, #tpu.memory_space<vmem>>, vector<8x512xf32>,
    %c0_66 = arith.constant 0 : index
    %c18_67 = arith.constant 18 : index
    %48 = vector.load %arg11[%c0_66, %c18_67] : memref<8x640xf32, #tpu.memory_space<vmem>>, vector<8x512xf32>
    %c40_68 = arith.constant 40 : index
    %c0_69 = arith.constant 0 : index
    %49 = vector.load %arg13[%c40_68, %c0_69] : memref<72x512xf32, #tpu.memory_space<vmem>>, vector<8x512xf32>
    tpu.vector_store %arg13[%c40_68, %c0_69], %48 {strides = array<i32>} : memref<72x512xf32, #tpu.memory_space<vmem>>, vector<8x512xf32>,
    %c0_70 = arith.constant 0 : index
    %c32_71 = arith.constant 32 : index
    %50 = vector.load %arg11[%c0_70, %c32_71] : memref<8x640xf32, #tpu.memory_space<vmem>>, vector<8x512xf32>
    %c48_72 = arith.constant 48 : index
    %c0_73 = arith.constant 0 : index
    %51 = vector.load %arg13[%c48_72, %c0_73] : memref<72x512xf32, #tpu.memory_space<vmem>>, vector<8x512xf32>
    tpu.vector_store %arg13[%c48_72, %c0_73], %50 {strides = array<i32>} : memref<72x512xf32, #tpu.memory_space<vmem>>, vector<8x512xf32>,
    %c0_74 = arith.constant 0 : index
    %c33_75 = arith.constant 33 : index
    %52 = vector.load %arg11[%c0_74, %c33_75] : memref<8x640xf32, #tpu.memory_space<vmem>>, vector<8x512xf32>
    %c56_76 = arith.constant 56 : index
    %c0_77 = arith.constant 0 : index
    %53 = vector.load %arg13[%c56_76, %c0_77] : memref<72x512xf32, #tpu.memory_space<vmem>>, vector<8x512xf32>
    tpu.vector_store %arg13[%c56_76, %c0_77], %52 {strides = array<i32>} : memref<72x512xf32, #tpu.memory_space<vmem>>, vector<8x512xf32>,
    %c0_78 = arith.constant 0 : index
    %c34_79 = arith.constant 34 : index
    %54 = vector.load %arg11[%c0_78, %c34_79] : memref<8x640xf32, #tpu.memory_space<vmem>>, vector<8x512xf32>
    %c64_80 = arith.constant 64 : index
    %c0_81 = arith.constant 0 : index
    %55 = vector.load %arg13[%c64_80, %c0_81] : memref<72x512xf32, #tpu.memory_space<vmem>>, vector<8x512xf32>
    tpu.vector_store %arg13[%c64_80, %c0_81], %54 {strides = array<i32>} : memref<72x512xf32, #tpu.memory_space<vmem>>, vector<8x512xf32>,
    %c0_82 = arith.constant 0 : index
    %c0_83 = arith.constant 0 : index
    %56 = vector.load %arg4[%c0_82, %c0_83] : memref<8x72xf32, #tpu.memory_space<vmem>>, vector<8x72xf32>
    %c0_84 = arith.constant 0 : index
    %c0_85 = arith.constant 0 : index
    %57 = vector.load %arg13[%c0_84, %c0_85] : memref<72x512xf32, #tpu.memory_space<vmem>>, vector<72x512xf32>
    %cst_86 = arith.constant dense<0.000000e+00> : vector<8x512xf32>
    %58 = tpu.matmul %56, %57, %cst_86 {dimension_numbers = #tpu.dot_dimension_numbers<[1], [0], [0], [1], [0, 0, 1, 1], [], []>} : vector<8x72xf32>, vector<72x512xf32>, vector<8x512xf32> -> vector<8x512xf32>
    %c0_87 = arith.constant 0 : index
    %c0_88 = arith.constant 0 : index
    %59 = vector.load %arg5[%c0_87, %c0_88] : memref<8x1xf32, #tpu.memory_space<vmem>>, vector<8x1xf32>
    %60 = vector.broadcast %59 : vector<8x1xf32> to vector<8x512xf32>
    %61 = arith.addf %58, %60 : vector<8x512xf32>
    %cst_89 = arith.constant 0.000000e+00 : f32
    %62 = vector.broadcast %cst_89 : f32 to vector<8x512xf32>
    %63 = arith.maximumf %61, %62 : vector<8x512xf32>
    %c0_90 = arith.constant 0 : index
    %c0_91 = arith.constant 0 : index
    %64 = vector.load %arg12[%c0_90, %c0_91] : memref<8x640xf32, #tpu.memory_space<vmem>>, vector<8x512xf32>
    tpu.vector_store %arg12[%c0_90, %c0_91], %63 {strides = array<i32>} : memref<8x640xf32, #tpu.memory_space<vmem>>, vector<8x512xf32>,
    %c0_92 = arith.constant 0 : index
    %c0_93 = arith.constant 0 : index
    %65 = vector.load %arg12[%c0_92, %c0_93] : memref<8x640xf32, #tpu.memory_space<vmem>>, vector<8x512xf32>
    %c0_94 = arith.constant 0 : index
    %c0_95 = arith.constant 0 : index
    %66 = vector.load %arg13[%c0_94, %c0_95] : memref<72x512xf32, #tpu.memory_space<vmem>>, vector<8x512xf32>
    tpu.vector_store %arg13[%c0_94, %c0_95], %65 {strides = array<i32>} : memref<72x512xf32, #tpu.memory_space<vmem>>, vector<8x512xf32>,
    %c0_96 = arith.constant 0 : index
    %c1_97 = arith.constant 1 : index
    %67 = vector.load %arg12[%c0_96, %c1_97] : memref<8x640xf32, #tpu.memory_space<vmem>>, vector<8x512xf32>
    %c8_98 = arith.constant 8 : index
    %c0_99 = arith.constant 0 : index
    %68 = vector.load %arg13[%c8_98, %c0_99] : memref<72x512xf32, #tpu.memory_space<vmem>>, vector<8x512xf32>
    tpu.vector_store %arg13[%c8_98, %c0_99], %67 {strides = array<i32>} : memref<72x512xf32, #tpu.memory_space<vmem>>, vector<8x512xf32>,
    %c0_100 = arith.constant 0 : index
    %c2_101 = arith.constant 2 : index
    %69 = vector.load %arg12[%c0_100, %c2_101] : memref<8x640xf32, #tpu.memory_space<vmem>>, vector<8x512xf32>
    %c16_102 = arith.constant 16 : index
    %c0_103 = arith.constant 0 : index
    %70 = vector.load %arg13[%c16_102, %c0_103] : memref<72x512xf32, #tpu.memory_space<vmem>>, vector<8x512xf32>
    tpu.vector_store %arg13[%c16_102, %c0_103], %69 {strides = array<i32>} : memref<72x512xf32, #tpu.memory_space<vmem>>, vector<8x512xf32>,
    %c0_104 = arith.constant 0 : index
    %c16_105 = arith.constant 16 : index
    %71 = vector.load %arg12[%c0_104, %c16_105] : memref<8x640xf32, #tpu.memory_space<vmem>>, vector<8x512xf32>
    %c24_106 = arith.constant 24 : index
    %c0_107 = arith.constant 0 : index
    %72 = vector.load %arg13[%c24_106, %c0_107] : memref<72x512xf32, #tpu.memory_space<vmem>>, vector<8x512xf32>
    tpu.vector_store %arg13[%c24_106, %c0_107], %71 {strides = array<i32>} : memref<72x512xf32, #tpu.memory_space<vmem>>, vector<8x512xf32>,
    %c0_108 = arith.constant 0 : index
    %c17_109 = arith.constant 17 : index
    %73 = vector.load %arg12[%c0_108, %c17_109] : memref<8x640xf32, #tpu.memory_space<vmem>>, vector<8x512xf32>
    %c32_110 = arith.constant 32 : index
    %c0_111 = arith.constant 0 : index
    %74 = vector.load %arg13[%c32_110, %c0_111] : memref<72x512xf32, #tpu.memory_space<vmem>>, vector<8x512xf32>
    tpu.vector_store %arg13[%c32_110, %c0_111], %73 {strides = array<i32>} : memref<72x512xf32, #tpu.memory_space<vmem>>, vector<8x512xf32>,
    %c0_112 = arith.constant 0 : index
    %c18_113 = arith.constant 18 : index
    %75 = vector.load %arg12[%c0_112, %c18_113] : memref<8x640xf32, #tpu.memory_space<vmem>>, vector<8x512xf32>
    %c40_114 = arith.constant 40 : index
    %c0_115 = arith.constant 0 : index
    %76 = vector.load %arg13[%c40_114, %c0_115] : memref<72x512xf32, #tpu.memory_space<vmem>>, vector<8x512xf32>
    tpu.vector_store %arg13[%c40_114, %c0_115], %75 {strides = array<i32>} : memref<72x512xf32, #tpu.memory_space<vmem>>, vector<8x512xf32>,
    %c0_116 = arith.constant 0 : index
    %c32_117 = arith.constant 32 : index
    %77 = vector.load %arg12[%c0_116, %c32_117] : memref<8x640xf32, #tpu.memory_space<vmem>>, vector<8x512xf32>
    %c48_118 = arith.constant 48 : index
    %c0_119 = arith.constant 0 : index
    %78 = vector.load %arg13[%c48_118, %c0_119] : memref<72x512xf32, #tpu.memory_space<vmem>>, vector<8x512xf32>
    tpu.vector_store %arg13[%c48_118, %c0_119], %77 {strides = array<i32>} : memref<72x512xf32, #tpu.memory_space<vmem>>, vector<8x512xf32>,
    %c0_120 = arith.constant 0 : index
    %c33_121 = arith.constant 33 : index
    %79 = vector.load %arg12[%c0_120, %c33_121] : memref<8x640xf32, #tpu.memory_space<vmem>>, vector<8x512xf32>
    %c56_122 = arith.constant 56 : index
    %c0_123 = arith.constant 0 : index
    %80 = vector.load %arg13[%c56_122, %c0_123] : memref<72x512xf32, #tpu.memory_space<vmem>>, vector<8x512xf32>
    tpu.vector_store %arg13[%c56_122, %c0_123], %79 {strides = array<i32>} : memref<72x512xf32, #tpu.memory_space<vmem>>, vector<8x512xf32>,
    %c0_124 = arith.constant 0 : index
    %c34_125 = arith.constant 34 : index
    %81 = vector.load %arg12[%c0_124, %c34_125] : memref<8x640xf32, #tpu.memory_space<vmem>>, vector<8x512xf32>
    %c64_126 = arith.constant 64 : index
    %c0_127 = arith.constant 0 : index
    %82 = vector.load %arg13[%c64_126, %c0_127] : memref<72x512xf32, #tpu.memory_space<vmem>>, vector<8x512xf32>
    tpu.vector_store %arg13[%c64_126, %c0_127], %81 {strides = array<i32>} : memref<72x512xf32, #tpu.memory_space<vmem>>, vector<8x512xf32>,
    %c0_128 = arith.constant 0 : index
    %c0_129 = arith.constant 0 : index
    %83 = vector.load %arg6[%c0_128, %c0_129] : memref<8x72xf32, #tpu.memory_space<vmem>>, vector<8x72xf32>
    %c0_130 = arith.constant 0 : index
    %c0_131 = arith.constant 0 : index
    %84 = vector.load %arg13[%c0_130, %c0_131] : memref<72x512xf32, #tpu.memory_space<vmem>>, vector<72x512xf32>
    %cst_132 = arith.constant dense<0.000000e+00> : vector<8x512xf32>
    %85 = tpu.matmul %83, %84, %cst_132 {dimension_numbers = #tpu.dot_dimension_numbers<[1], [0], [0], [1], [0, 0, 1, 1], [], []>} : vector<8x72xf32>, vector<72x512xf32>, vector<8x512xf32> -> vector<8x512xf32>
    %c0_133 = arith.constant 0 : index
    %c0_134 = arith.constant 0 : index
    %86 = vector.load %arg7[%c0_133, %c0_134] : memref<8x1xf32, #tpu.memory_space<vmem>>, vector<8x1xf32>
    %87 = vector.broadcast %86 : vector<8x1xf32> to vector<8x512xf32>
    %88 = arith.addf %85, %87 : vector<8x512xf32>
    %cst_135 = arith.constant 0.000000e+00 : f32
    %89 = vector.broadcast %cst_135 : f32 to vector<8x512xf32>
    %90 = arith.maximumf %88, %89 : vector<8x512xf32>
    %c0_136 = arith.constant 0 : index
    %c0_137 = arith.constant 0 : index
    %91 = vector.load %arg8[%c0_136, %c0_137] : memref<512x2xf32, #tpu.memory_space<vmem>>, vector<512x2xf32>
    %cst_138 = arith.constant dense<0.000000e+00> : vector<8x2xf32>
    %92 = tpu.matmul %90, %91, %cst_138 {dimension_numbers = #tpu.dot_dimension_numbers<[1], [0], [0], [1], [0, 0, 1, 1], [], []>} : vector<8x512xf32>, vector<512x2xf32>, vector<8x2xf32> -> vector<8x2xf32>
    %c0_139 = arith.constant 0 : index
    %c0_140 = arith.constant 0 : index
    %c0_141 = arith.constant 0 : index
    %93 = vector.load %arg9[%c0_139, %c0_140, %c0_141] : memref<1x8x2xf32, #tpu.memory_space<vmem>>, vector<1x8x2xf32>
    %94 = vector.shape_cast %93 : vector<1x8x2xf32> to vector<8x2xf32>
    %95 = vector.shape_cast %92 : vector<8x2xf32> to vector<1x8x2xf32>
    tpu.vector_store %arg9[%c0_139, %c0_140, %c0_141], %95 {strides = array<i32>} : memref<1x8x2xf32, #tpu.memory_space<vmem>>, vector<1x8x2xf32>,
    return
  }
  func.func @transform_0(%arg0: i32) -> (i32, i32, i32) {
    %c0_i32 = arith.constant 0 : i32
    %c0_i32_0 = arith.constant 0 : i32
    %c0_i32_1 = arith.constant 0 : i32
    return %arg0, %c0_i32, %c0_i32_0 : i32, i32, i32
  }
  func.func @transform_1(%arg0: i32) -> (i32, i32) {
    %c0_i32 = arith.constant 0 : i32
    %c0_i32_0 = arith.constant 0 : i32
    %c0_i32_1 = arith.constant 0 : i32
    return %c0_i32, %c0_i32_0 : i32, i32
  }
  func.func @transform_2(%arg0: i32) -> (i32, i32) {
    %c0_i32 = arith.constant 0 : i32
    %c0_i32_0 = arith.constant 0 : i32
    %c0_i32_1 = arith.constant 0 : i32
    return %c0_i32, %c0_i32_0 : i32, i32
  }
  func.func @transform_3(%arg0: i32) -> (i32, i32) {
    %c0_i32 = arith.constant 0 : i32
    %c0_i32_0 = arith.constant 0 : i32
    %c0_i32_1 = arith.constant 0 : i32
    return %c0_i32, %c0_i32_0 : i32, i32
  }
  func.func @transform_4(%arg0: i32) -> (i32, i32) {
    %c0_i32 = arith.constant 0 : i32
    %c0_i32_0 = arith.constant 0 : i32
    %c0_i32_1 = arith.constant 0 : i32
    return %c0_i32, %c0_i32_0 : i32, i32
  }
  func.func @transform_5(%arg0: i32) -> (i32, i32) {
    %c0_i32 = arith.constant 0 : i32
    %c0_i32_0 = arith.constant 0 : i32
    %c0_i32_1 = arith.constant 0 : i32
    return %c0_i32, %c0_i32_0 : i32, i32
  }
  func.func @transform_6(%arg0: i32) -> (i32, i32) {
    %c0_i32 = arith.constant 0 : i32
    %c0_i32_0 = arith.constant 0 : i32
    %c0_i32_1 = arith.constant 0 : i32
    return %c0_i32, %c0_i32_0 : i32, i32
  }
  func.func @transform_7(%arg0: i32) -> (i32, i32) {
    %c0_i32 = arith.constant 0 : i32
    %c0_i32_0 = arith.constant 0 : i32
    %c0_i32_1 = arith.constant 0 : i32
    return %c0_i32, %c0_i32_0 : i32, i32
  }
  func.func @transform_8(%arg0: i32) -> (i32, i32, i32) {
    %c0_i32 = arith.constant 0 : i32
    %c0_i32_0 = arith.constant 0 : i32
    %c0_i32_1 = arith.constant 0 : i32
    return %arg0, %c0_i32, %c0_i32_0 : i32, i32, i32
  }
}

</mosaic_0001>

<llo_original>
// kernel: tpu_custom_call.1
$region0: #{tpu_custom_call.1}
  #allocation0 [shape = 'u32[]', space=smem, size = 0x4, offset = 0x4, fixed_abs, tag = 'smem constant byte address 0x4 - core index']
  #allocation1 [shape = 'u32[144,128]{1,0:T(1,128)}', space=vmem, size = 0x12000, scoped, tag = 'internal scratch']
  #allocation2 [shape = 'f32[3,640]{1,0:T(4,128)}', space=vmem, size = 0x2800, scoped, tag = 'scratch operand']
  #allocation3 [shape = 'f32[8,640]{1,0:T(8,128)}', space=vmem, size = 0x5000, scoped, tag = 'scratch operand']
  #allocation4 [shape = 'f32[8,640]{1,0:T(8,128)}', space=vmem, size = 0x5000, scoped, tag = 'scratch operand']
  #allocation5 [shape = 'f32[72,512]{1,0:T(8,128)}', space=vmem, size = 0x24000, scoped, tag = 'scratch operand']
  %s0 = inlined_call_operand.vmem [shape: f32[1,3,512], index: 0, kind: input, shape index: {}]
  %s1 = inlined_call_operand.vmem [shape: f32[8,72], index: 1, kind: input, shape index: {}]
  %s2 = inlined_call_operand.vmem [shape: f32[8,1], index: 2, kind: input, shape index: {}]
  %s3 = inlined_call_operand.vmem [shape: f32[8,72], index: 3, kind: input, shape index: {}]
  %s4 = inlined_call_operand.vmem [shape: f32[8,1], index: 4, kind: input, shape index: {}]
  %s5 = inlined_call_operand.vmem [shape: f32[8,72], index: 5, kind: input, shape index: {}]
  %s6 = inlined_call_operand.vmem [shape: f32[8,1], index: 6, kind: input, shape index: {}]
  %s7 = inlined_call_operand.vmem [shape: f32[512,2], index: 7, kind: input, shape index: {}]
  %s8 = inlined_call_operand.vmem [shape: f32[1,8,2], index: 8, kind: output, shape index: {}]
  %s9 = sld [smem:[#allocation0]]
  $region42: #{tpu_custom_call.1} parent=0
    _
  %s11 = ssub.s32 1, %s9
  %s12 = scalar_select 0, %s11, %s9
  // Predicated region
  $region2: #{tpu_custom_call.1} parent=0 // pred_check
    _
  $region3: #{tpu_custom_call.1} parent=0 // pred_check_branch
    %14 = sbr.rel (0) target = $region5
  $region4: #{tpu_custom_call.1} parent=0 // pred_region
    _
  $region5: #{tpu_custom_call.1} parent=0 // pred_fallthru
    _
  // Predicated region
  $region6: #{tpu_custom_call.1} parent=0 // pred_check
    _
  $region7: #{tpu_custom_call.1} parent=0 // pred_check_branch
    %16 = sbr.rel (0) target = $region9
  $region8: #{tpu_custom_call.1} parent=0 // pred_region
    _
  $region9: #{tpu_custom_call.1} parent=0 // pred_fallthru
    _
  // Predicated region
  $region10: #{tpu_custom_call.1} parent=0 // pred_check
    _
  $region11: #{tpu_custom_call.1} parent=0 // pred_check_branch
    %18 = sbr.rel (0) target = $region13
  $region12: #{tpu_custom_call.1} parent=0 // pred_region
    _
  $region13: #{tpu_custom_call.1} parent=0 // pred_fallthru
    _
  // Predicated region
  $region14: #{tpu_custom_call.1} parent=0 // pred_check
    _
  $region15: #{tpu_custom_call.1} parent=0 // pred_check_branch
    %20 = sbr.rel (0) target = $region17
  $region16: #{tpu_custom_call.1} parent=0 // pred_region
    _
  $region17: #{tpu_custom_call.1} parent=0 // pred_fallthru
    _
  // Predicated region
  $region18: #{tpu_custom_call.1} parent=0 // pred_check
    _
  $region19: #{tpu_custom_call.1} parent=0 // pred_check_branch
    %22 = sbr.rel (0) target = $region21
  $region20: #{tpu_custom_call.1} parent=0 // pred_region
    _
  $region21: #{tpu_custom_call.1} parent=0 // pred_fallthru
    _
  // Predicated region
  $region22: #{tpu_custom_call.1} parent=0 // pred_check
    _
  $region23: #{tpu_custom_call.1} parent=0 // pred_check_branch
    %24 = sbr.rel (0) target = $region25
  $region24: #{tpu_custom_call.1} parent=0 // pred_region
    _
  $region25: #{tpu_custom_call.1} parent=0 // pred_fallthru
    _
  // Predicated region
  $region26: #{tpu_custom_call.1} parent=0 // pred_check
    _
  $region27: #{tpu_custom_call.1} parent=0 // pred_check_branch
    %26 = sbr.rel (0) target = $region29
  $region28: #{tpu_custom_call.1} parent=0 // pred_region
    _
  $region29: #{tpu_custom_call.1} parent=0 // pred_fallthru
    _
  // Predicated region
  $region30: #{tpu_custom_call.1} parent=0 // pred_check
    _
  $region31: #{tpu_custom_call.1} parent=0 // pred_check_branch
    %28 = sbr.rel (0) target = $region33
  $region32: #{tpu_custom_call.1} parent=0 // pred_region
    _
  $region33: #{tpu_custom_call.1} parent=0 // pred_fallthru
    _
  %v29 = vld [vmem:[%s0] sm:$0x77]
  %v30 = vld [vmem:[%s0 + $0x8] sm:$0x77]
  %31 = vst [vmem:[#allocation2] sm:$0x77] %v29
  %32 = vst [vmem:[#allocation2 + $0x8] sm:$0x77] %v30
  %33 = vst [vmem:[#allocation2 + $0x10] sm:$0x7] 0.0
  %34 = vst [vmem:[#allocation3 + $0x20] sm:$0xff] 0.0
  %35 = vst [vmem:[#allocation4 + $0x20] sm:$0xff] 0.0
  %36 = vst [vmem:[#allocation5] sm:$0xff] 0.0
  %37 = vst [vmem:[#allocation5 + $0x8] sm:$0xff] 0.0
  %38 = vst [vmem:[#allocation5 + $0x10] sm:$0xff] 0.0
  %39 = vst [vmem:[#allocation5 + $0x18] sm:$0xff] 0.0
  %40 = vst [vmem:[#allocation5 + $0x20] sm:$0xff] 0.0
  %41 = vst [vmem:[#allocation5 + $0x28] sm:$0xff] 0.0
  %42 = vst [vmem:[#allocation5 + $0x30] sm:$0xff] 0.0
  %43 = vst [vmem:[#allocation5 + $0x38] sm:$0xff] 0.0
  %44 = vst [vmem:[#allocation5 + $0x40] sm:$0xff] 0.0
  %45 = vst [vmem:[#allocation5 + $0x48] sm:$0xff] 0.0
  %46 = vst [vmem:[#allocation5 + $0x50] sm:$0xff] 0.0
  %47 = vst [vmem:[#allocation5 + $0x58] sm:$0xff] 0.0
  %48 = vst [vmem:[#allocation5 + $0x60] sm:$0xff] 0.0
  %49 = vst [vmem:[#allocation5 + $0x68] sm:$0xff] 0.0
  %50 = vst [vmem:[#allocation5 + $0x70] sm:$0xff] 0.0
  %51 = vst [vmem:[#allocation5 + $0x78] sm:$0xff] 0.0
  %52 = vst [vmem:[#allocation5 + $0x80] sm:$0xff] 0.0
  %53 = vst [vmem:[#allocation5 + $0x88] sm:$0xff] 0.0
  %54 = vst [vmem:[#allocation5 + $0x90] sm:$0xff] 0.0
  %55 = vst [vmem:[#allocation5 + $0x98] sm:$0xff] 0.0
  %56 = vst [vmem:[#allocation5 + $0xa0] sm:$0xff] 0.0
  %57 = vst [vmem:[#allocation5 + $0xa8] sm:$0xff] 0.0
  %58 = vst [vmem:[#allocation5 + $0xb0] sm:$0xff] 0.0
  %59 = vst [vmem:[#allocation5 + $0xb8] sm:$0xff] 0.0
  %60 = vst [vmem:[#allocation5 + $0xc0] sm:$0xff] 0.0
  %61 = vst [vmem:[#allocation5 + $0xc8] sm:$0xff] 0.0
  %62 = vst [vmem:[#allocation5 + $0xd0] sm:$0xff] 0.0
  %63 = vst [vmem:[#allocation5 + $0xd8] sm:$0xff] 0.0
  %64 = vst [vmem:[#allocation5 + $0xe0] sm:$0xff] 0.0
  %65 = vst [vmem:[#allocation5 + $0xe8] sm:$0xff] 0.0
  %66 = vst [vmem:[#allocation5 + $0xf0] sm:$0xff] 0.0
  %67 = vst [vmem:[#allocation5 + $0xf8] sm:$0xff] 0.0
  %68 = vst [vmem:[#allocation5 + $0x100] sm:$0xff] 0.0
  %69 = vst [vmem:[#allocation5 + $0x108] sm:$0xff] 0.0
  %70 = vst [vmem:[#allocation5 + $0x110] sm:$0xff] 0.0
  %71 = vst [vmem:[#allocation5 + $0x118] sm:$0xff] 0.0
  %v72 = vld [vmem:[#allocation2] sm:$0x77]
  %v73 = vld [vmem:[#allocation2 + $0x8] sm:$0x77]
  %v76 = vcombine.high %v72, %v72
  %v77 = vcombine.high %v73, %v73
  %80 = vst [vmem:[#allocation5] sm:$0x7] %v72
  %81 = vst [vmem:[#allocation5 + $0x8] sm:$0x7] %v76
  %82 = vst [vmem:[#allocation5 + $0x10] sm:$0x7] %v73
  %83 = vst [vmem:[#allocation5 + $0x18] sm:$0x7] %v77
  %v84 = vld [vmem:[#allocation2] sm:$0x77]
  %v85 = vld [vmem:[#allocation2 + $0x8] sm:$0x77]
  %v86 = vld [vmem:[#allocation2 + $0x10] sm:$0x7]
  %v90 = vcombine.high %v84, %v84
  %v91 = vcombine.high %v85, %v85
  %92 = vrot.lane.b32.xlu0 %v84, 127
  %v93 = vpop.permute.xlu0 %92
  %94 = vrot.lane.b32.xlu0 %v90, 127
  %v95 = vpop.permute.xlu0 %94
  %96 = vrot.lane.b32.xlu0 %v85, 127
  %v97 = vpop.permute.xlu0 %96
  %98 = vrot.lane.b32.xlu0 %v91, 127
  %v99 = vpop.permute.xlu0 %98
  %100 = vrot.lane.b32.xlu0 %v86, 127
  %v101 = vpop.permute.xlu0 %100
  %vm102 = vcmask 1039360
  %v103 = vsel %vm102, %v93, %v95
  %v104 = vsel %vm102, %v95, %v97
  %v105 = vsel %vm102, %v97, %v99
  %v106 = vsel %vm102, %v99, %v101
  %111 = vst [vmem:[#allocation5 + $0x20] sm:$0x7] %v103
  %112 = vst [vmem:[#allocation5 + $0x28] sm:$0x7] %v104
  %113 = vst [vmem:[#allocation5 + $0x30] sm:$0x7] %v105
  %114 = vst [vmem:[#allocation5 + $0x38] sm:$0x7] %v106
  %v115 = vld [vmem:[#allocation2] sm:$0x77]
  %v116 = vld [vmem:[#allocation2 + $0x8] sm:$0x77]
  %v117 = vld [vmem:[#allocation2 + $0x10] sm:$0x7]
  %v121 = vcombine.high %v115, %v115
  %v122 = vcombine.high %v116, %v116
  %123 = vrot.lane.b32.xlu0 %v115, 126
  %v124 = vpop.permute.xlu0 %123
  %125 = vrot.lane.b32.xlu0 %v121, 126
  %v126 = vpop.permute.xlu0 %125
  %127 = vrot.lane.b32.xlu0 %v116, 126
  %v128 = vpop.permute.xlu0 %127
  %129 = vrot.lane.b32.xlu0 %v122, 126
  %v130 = vpop.permute.xlu0 %129
  %131 = vrot.lane.b32.xlu0 %v117, 126
  %v132 = vpop.permute.xlu0 %131
  %vm133 = vcmask 1031168
  %v134 = vsel %vm133, %v124, %v126
  %v135 = vsel %vm133, %v126, %v128
  %v136 = vsel %vm133, %v128, %v130
  %v137 = vsel %vm133, %v130, %v132
  %142 = vst [vmem:[#allocation5 + $0x40] sm:$0x7] %v134
  %143 = vst [vmem:[#allocation5 + $0x48] sm:$0x7] %v135
  %144 = vst [vmem:[#allocation5 + $0x50] sm:$0x7] %v136
  %145 = vst [vmem:[#allocation5 + $0x58] sm:$0x7] %v137
  %v146 = vld [vmem:[#allocation2] sm:$0x77]
  %v147 = vld [vmem:[#allocation2 + $0x8] sm:$0x77]
  %v148 = vld [vmem:[#allocation2 + $0x10] sm:$0x7]
  %v152 = vcombine.high %v146, %v146
  %v153 = vcombine.high %v147, %v147
  %154 = vrot.lane.b32.xlu0 %v146, 112
  %v155 = vpop.permute.xlu0 %154
  %156 = vrot.lane.b32.xlu0 %v152, 112
  %v157 = vpop.permute.xlu0 %156
  %158 = vrot.lane.b32.xlu0 %v147, 112
  %v159 = vpop.permute.xlu0 %158
  %160 = vrot.lane.b32.xlu0 %v153, 112
  %v161 = vpop.permute.xlu0 %160
  %162 = vrot.lane.b32.xlu0 %v148, 112
  %v163 = vpop.permute.xlu0 %162
  %vm164 = vcmask 916480
  %v165 = vsel %vm164, %v155, %v157
  %v166 = vsel %vm164, %v157, %v159
  %v167 = vsel %vm164, %v159, %v161
  %v168 = vsel %vm164, %v161, %v163
  %173 = vst [vmem:[#allocation5 + $0x60] sm:$0x7] %v165
  %174 = vst [vmem:[#allocation5 + $0x68] sm:$0x7] %v166
  %175 = vst [vmem:[#allocation5 + $0x70] sm:$0x7] %v167
  %176 = vst [vmem:[#allocation5 + $0x78] sm:$0x7] %v168
  %v177 = vld [vmem:[#allocation2] sm:$0x77]
  %v178 = vld [vmem:[#allocation2 + $0x8] sm:$0x77]
  %v179 = vld [vmem:[#allocation2 + $0x10] sm:$0x7]
  %v183 = vcombine.high %v177, %v177
  %v184 = vcombine.high %v178, %v178
  %185 = vrot.lane.b32.xlu0 %v177, 111
  %v186 = vpop.permute.xlu0 %185
  %187 = vrot.lane.b32.xlu0 %v183, 111
  %v188 = vpop.permute.xlu0 %187
  %189 = vrot.lane.b32.xlu0 %v178, 111
  %v190 = vpop.permute.xlu0 %189
  %191 = vrot.lane.b32.xlu0 %v184, 111
  %v192 = vpop.permute.xlu0 %191
  %193 = vrot.lane.b32.xlu0 %v179, 111
  %v194 = vpop.permute.xlu0 %193
  %vm195 = vcmask 908288
  %v196 = vsel %vm195, %v186, %v188
  %v197 = vsel %vm195, %v188, %v190
  %v198 = vsel %vm195, %v190, %v192
  %v199 = vsel %vm195, %v192, %v194
  %204 = vst [vmem:[#allocation5 + $0x80] sm:$0x7] %v196
  %205 = vst [vmem:[#allocation5 + $0x88] sm:$0x7] %v197
  %206 = vst [vmem:[#allocation5 + $0x90] sm:$0x7] %v198
  %207 = vst [vmem:[#allocation5 + $0x98] sm:$0x7] %v199
  %v208 = vld [vmem:[#allocation2] sm:$0x77]
  %v209 = vld [vmem:[#allocation2 + $0x8] sm:$0x77]
  %v210 = vld [vmem:[#allocation2 + $0x10] sm:$0x7]
  %v214 = vcombine.high %v208, %v208
  %v215 = vcombine.high %v209, %v209
  %216 = vrot.lane.b32.xlu0 %v208, 110
  %v217 = vpop.permute.xlu0 %216
  %218 = vrot.lane.b32.xlu0 %v214, 110
  %v219 = vpop.permute.xlu0 %218
  %220 = vrot.lane.b32.xlu0 %v209, 110
  %v221 = vpop.permute.xlu0 %220
  %222 = vrot.lane.b32.xlu0 %v215, 110
  %v223 = vpop.permute.xlu0 %222
  %224 = vrot.lane.b32.xlu0 %v210, 110
  %v225 = vpop.permute.xlu0 %224
  %vm226 = vcmask 900096
  %v227 = vsel %vm226, %v217, %v219
  %v228 = vsel %vm226, %v219, %v221
  %v229 = vsel %vm226, %v221, %v223
  %v230 = vsel %vm226, %v223, %v225
  %235 = vst [vmem:[#allocation5 + $0xa0] sm:$0x7] %v227
  %236 = vst [vmem:[#allocation5 + $0xa8] sm:$0x7] %v228
  %237 = vst [vmem:[#allocation5 + $0xb0] sm:$0x7] %v229
  %238 = vst [vmem:[#allocation5 + $0xb8] sm:$0x7] %v230
  %v239 = vld [vmem:[#allocation2] sm:$0x77]
  %v240 = vld [vmem:[#allocation2 + $0x8] sm:$0x77]
  %v241 = vld [vmem:[#allocation2 + $0x10] sm:$0x7]
  %v245 = vcombine.high %v239, %v239
  %v246 = vcombine.high %v240, %v240
  %247 = vrot.lane.b32.xlu0 %v239, 96
  %v248 = vpop.permute.xlu0 %247
  %249 = vrot.lane.b32.xlu0 %v245, 96
  %v250 = vpop.permute.xlu0 %249
  %251 = vrot.lane.b32.xlu0 %v240, 96
  %v252 = vpop.permute.xlu0 %251
  %253 = vrot.lane.b32.xlu0 %v246, 96
  %v254 = vpop.permute.xlu0 %253
  %255 = vrot.lane.b32.xlu0 %v241, 96
  %v256 = vpop.permute.xlu0 %255
  %vm257 = vcmask 785408
  %v258 = vsel %vm257, %v248, %v250
  %v259 = vsel %vm257, %v250, %v252
  %v260 = vsel %vm257, %v252, %v254
  %v261 = vsel %vm257, %v254, %v256
  %266 = vst [vmem:[#allocation5 + $0xc0] sm:$0x7] %v258
  %267 = vst [vmem:[#allocation5 + $0xc8] sm:$0x7] %v259
  %268 = vst [vmem:[#allocation5 + $0xd0] sm:$0x7] %v260
  %269 = vst [vmem:[#allocation5 + $0xd8] sm:$0x7] %v261
  %v270 = vld [vmem:[#allocation2] sm:$0x77]
  %v271 = vld [vmem:[#allocation2 + $0x8] sm:$0x77]
  %v272 = vld [vmem:[#allocation2 + $0x10] sm:$0x7]
  %v276 = vcombine.high %v270, %v270
  %v277 = vcombine.high %v271, %v271
  %278 = vrot.lane.b32.xlu0 %v270, 95
  %v279 = vpop.permute.xlu0 %278
  %280 = vrot.lane.b32.xlu0 %v276, 95
  %v281 = vpop.permute.xlu0 %280
  %282 = vrot.lane.b32.xlu0 %v271, 95
  %v283 = vpop.permute.xlu0 %282
  %284 = vrot.lane.b32.xlu0 %v277, 95
  %v285 = vpop.permute.xlu0 %284
  %286 = vrot.lane.b32.xlu0 %v272, 95
  %v287 = vpop.permute.xlu0 %286
  %vm288 = vcmask 777216
  %v289 = vsel %vm288, %v279, %v281
  %v290 = vsel %vm288, %v281, %v283
  %v291 = vsel %vm288, %v283, %v285
  %v292 = vsel %vm288, %v285, %v287
  %297 = vst [vmem:[#allocation5 + $0xe0] sm:$0x7] %v289
  %298 = vst [vmem:[#allocation5 + $0xe8] sm:$0x7] %v290
  %299 = vst [vmem:[#allocation5 + $0xf0] sm:$0x7] %v291
  %300 = vst [vmem:[#allocation5 + $0xf8] sm:$0x7] %v292
  %v301 = vld [vmem:[#allocation2] sm:$0x77]
  %v302 = vld [vmem:[#allocation2 + $0x8] sm:$0x77]
  %v303 = vld [vmem:[#allocation2 + $0x10] sm:$0x7]
  %v307 = vcombine.high %v301, %v301
  %v308 = vcombine.high %v302, %v302
  %309 = vrot.lane.b32.xlu0 %v301, 94
  %v310 = vpop.permute.xlu0 %309
  %311 = vrot.lane.b32.xlu0 %v307, 94
  %v312 = vpop.permute.xlu0 %311
  %313 = vrot.lane.b32.xlu0 %v302, 94
  %v314 = vpop.permute.xlu0 %313
  %315 = vrot.lane.b32.xlu0 %v308, 94
  %v316 = vpop.permute.xlu0 %315
  %317 = vrot.lane.b32.xlu0 %v303, 94
  %v318 = vpop.permute.xlu0 %317
  %vm319 = vcmask 769024
  %v320 = vsel %vm319, %v310, %v312
  %v321 = vsel %vm319, %v312, %v314
  %v322 = vsel %vm319, %v314, %v316
  %v323 = vsel %vm319, %v316, %v318
  %328 = vst [vmem:[#allocation5 + $0x100] sm:$0x7] %v320
  %329 = vst [vmem:[#allocation5 + $0x108] sm:$0x7] %v321
  %330 = vst [vmem:[#allocation5 + $0x110] sm:$0x7] %v322
  %331 = vst [vmem:[#allocation5 + $0x118] sm:$0x7] %v323
  %v332 = vld [vmem:[%s1] sm:$0xff]
  %v333 = vld [vmem:[#allocation5] sm:$0xff]
  %v334 = vld [vmem:[#allocation5 + $0x8] sm:$0xff]
  %v335 = vld [vmem:[#allocation5 + $0x10] sm:$0xff]
  %v336 = vld [vmem:[#allocation5 + $0x18] sm:$0xff]
  %v337 = vld [vmem:[#allocation5 + $0x20] sm:$0xff]
  %v338 = vld [vmem:[#allocation5 + $0x28] sm:$0xff]
  %v339 = vld [vmem:[#allocation5 + $0x30] sm:$0xff]
  %v340 = vld [vmem:[#allocation5 + $0x38] sm:$0xff]
  %v341 = vld [vmem:[#allocation5 + $0x40] sm:$0xff]
  %v342 = vld [vmem:[#allocation5 + $0x48] sm:$0xff]
  %v343 = vld [vmem:[#allocation5 + $0x50] sm:$0xff]
  %v344 = vld [vmem:[#allocation5 + $0x58] sm:$0xff]
  %v345 = vld [vmem:[#allocation5 + $0x60] sm:$0xff]
  %v346 = vld [vmem:[#allocation5 + $0x68] sm:$0xff]
  %v347 = vld [vmem:[#allocation5 + $0x70] sm:$0xff]
  %v348 = vld [vmem:[#allocation5 + $0x78] sm:$0xff]
  %v349 = vld [vmem:[#allocation5 + $0x80] sm:$0xff]
  %v350 = vld [vmem:[#allocation5 + $0x88] sm:$0xff]
  %v351 = vld [vmem:[#allocation5 + $0x90] sm:$0xff]
  %v352 = vld [vmem:[#allocation5 + $0x98] sm:$0xff]
  %v353 = vld [vmem:[#allocation5 + $0xa0] sm:$0xff]
  %v354 = vld [vmem:[#allocation5 + $0xa8] sm:$0xff]
  %v355 = vld [vmem:[#allocation5 + $0xb0] sm:$0xff]
  %v356 = vld [vmem:[#allocation5 + $0xb8] sm:$0xff]
  %v357 = vld [vmem:[#allocation5 + $0xc0] sm:$0xff]
  %v358 = vld [vmem:[#allocation5 + $0xc8] sm:$0xff]
  %v359 = vld [vmem:[#allocation5 + $0xd0] sm:$0xff]
  %v360 = vld [vmem:[#allocation5 + $0xd8] sm:$0xff]
  %v361 = vld [vmem:[#allocation5 + $0xe0] sm:$0xff]
  %v362 = vld [vmem:[#allocation5 + $0xe8] sm:$0xff]
  %v363 = vld [vmem:[#allocation5 + $0xf0] sm:$0xff]
  %v364 = vld [vmem:[#allocation5 + $0xf8] sm:$0xff]
  %v365 = vld [vmem:[#allocation5 + $0x100] sm:$0xff]
  %v366 = vld [vmem:[#allocation5 + $0x108] sm:$0xff]
  %v367 = vld [vmem:[#allocation5 + $0x110] sm:$0xff]
  %v368 = vld [vmem:[#allocation5 + $0x118] sm:$0xff]
  %v369 = vld [vmem:[%s2] sm:$0xff]
  %371 = vset.pattern.permute.xlu0 0
  %372 = vperm.xlu0 %371, %v369
  %v373 = vpop.permute.xlu0 %372
  %vm375 = vcmask 588800
  %v377 = vsel %vm375, %v332, 0
  %379 = vmatprep.subr.mxu0 0.0
  %380 = vmatpush1.msra.mxu0 0.0
  %381 = vmatprep.subr.mxu0 0.0
  %382 = vmatpush1.msra.mxu0 0.0
  %383 = vmatprep.subr.mxu0 0.0
  %384 = vmatpush1.msra.mxu0 0.0
  %385 = vmatprep.subr.mxu0 0.0
  %386 = vmatpush1.msra.mxu0 0.0
  %387 = vmatprep.subr.mxu0 0.0
  %388 = vmatpush1.msra.mxu0 0.0
  %389 = vmatprep.subr.mxu0 0.0
  %390 = vmatpush1.msra.mxu0 0.0
  %391 = vmatprep.subr.mxu0 0.0
  %392 = vmatpush1.msra.mxu0 0.0
  %393 = vmatprep.subr.mxu0 %v366
  %394 = vmatpush1.msra.mxu0 %v365
  %395 = vmatprep.subr.mxu0 %v362
  %396 = vmatpush1.msra.mxu0 %v361
  %397 = vmatprep.subr.mxu0 %v358
  %398 = vmatpush1.msra.mxu0 %v357
  %399 = vmatprep.subr.mxu0 %v354
  %400 = vmatpush1.msra.mxu0 %v353
  %401 = vmatprep.subr.mxu0 %v350
  %402 = vmatpush1.msra.mxu0 %v349
  %403 = vmatprep.subr.mxu0 %v346
  %404 = vmatpush1.msra.mxu0 %v345
  %405 = vmatprep.subr.mxu0 %v342
  %406 = vmatpush1.msra.mxu0 %v341
  %407 = vmatprep.subr.mxu0 %v338
  %408 = vmatpush1.msra.mxu0 %v337
  %409 = vmatprep.subr.mxu0 %v334
  %410 = vmatpush1.msra.mxu0 %v333
  %411 = vmatprep.subr.mxu0 0.0
  %412 = vmatpush2.msra.mxu0 0.0
  %413 = vmatprep.subr.mxu0 0.0
  %414 = vmatpush2.msra.mxu0 0.0
  %415 = vmatprep.subr.mxu0 0.0
  %416 = vmatpush2.msra.mxu0 0.0
  %417 = vmatprep.subr.mxu0 0.0
  %418 = vmatpush2.msra.mxu0 0.0
  %419 = vmatprep.subr.mxu0 0.0
  %420 = vmatpush2.msra.mxu0 0.0
  %421 = vmatprep.subr.mxu0 0.0
  %422 = vmatpush2.msra.mxu0 0.0
  %423 = vmatprep.subr.mxu0 0.0
  %424 = vmatpush2.msra.mxu0 0.0
  %425 = vmatprep.subr.mxu0 0.0
  %426 = vmatpush2.msra.mxu0 0.0
  %427 = vmatprep.subr.mxu0 0.0
  %428 = vmatpush2.msra.mxu0 0.0
  %429 = vmatprep.subr.mxu0 0.0
  %430 = vmatpush2.msra.mxu0 0.0
  %431 = vmatprep.subr.mxu0 0.0
  %432 = vmatpush2.msra.mxu0 0.0
  %433 = vmatprep.subr.mxu0 0.0
  %434 = vmatpush2.msra.mxu0 0.0
  %435 = vmatprep.subr.mxu0 0.0
  %436 = vmatpush2.msra.mxu0 0.0
  %437 = vmatprep.subr.mxu0 0.0
  %438 = vmatpush2.msra.mxu0 0.0
  %439 = vmatprep.subr.mxu0 0.0
  %440 = vmatpush2.msra.mxu0 0.0
  %441 = vmatprep.subr.mxu0 0.0
  %442 = vmatpush2.msra.mxu0 0.0
  %443 = vmatprep.mubr.f32.mxu0 0.0
  %444 = vmatmul.mubr.f32.gmra.mxu0 %v377
  %v445 = vpop.f32.mrf.mxu0
  %v446 = vadd.f32 %v373, %v445
  %v447 = vpop.f32.mrf.mxu0
  %v448 = vadd.f32 %v373, %v447
  %449 = vdwg.mxu0
  %450 = vmatprep.subr.mxu0 0.0
  %451 = vmatpush1.msra.mxu0 0.0
  %452 = vmatprep.subr.mxu0 0.0
  %453 = vmatpush1.msra.mxu0 0.0
  %454 = vmatprep.subr.mxu0 0.0
  %455 = vmatpush1.msra.mxu0 0.0
  %456 = vmatprep.subr.mxu0 0.0
  %457 = vmatpush1.msra.mxu0 0.0
  %458 = vmatprep.subr.mxu0 0.0
  %459 = vmatpush1.msra.mxu0 0.0
  %460 = vmatprep.subr.mxu0 0.0
  %461 = vmatpush1.msra.mxu0 0.0
  %462 = vmatprep.subr.mxu0 0.0
  %463 = vmatpush1.msra.mxu0 0.0
  %464 = vmatprep.subr.mxu0 %v368
  %465 = vmatpush1.msra.mxu0 %v367
  %466 = vmatprep.subr.mxu0 %v364
  %467 = vmatpush1.msra.mxu0 %v363
  %468 = vmatprep.subr.mxu0 %v360
  %469 = vmatpush1.msra.mxu0 %v359
  %470 = vmatprep.subr.mxu0 %v356
  %471 = vmatpush1.msra.mxu0 %v355
  %472 = vmatprep.subr.mxu0 %v352
  %473 = vmatpush1.msra.mxu0 %v351
  %474 = vmatprep.subr.mxu0 %v348
  %475 = vmatpush1.msra.mxu0 %v347
  %476 = vmatprep.subr.mxu0 %v344
  %477 = vmatpush1.msra.mxu0 %v343
  %478 = vmatprep.subr.mxu0 %v340
  %479 = vmatpush1.msra.mxu0 %v339
  %480 = vmatprep.subr.mxu0 %v336
  %481 = vmatpush1.msra.mxu0 %v335
  %482 = vmatprep.subr.mxu0 0.0
  %483 = vmatpush2.msra.mxu0 0.0
  %484 = vmatprep.subr.mxu0 0.0
  %485 = vmatpush2.msra.mxu0 0.0
  %486 = vmatprep.subr.mxu0 0.0
  %487 = vmatpush2.msra.mxu0 0.0
  %488 = vmatprep.subr.mxu0 0.0
  %489 = vmatpush2.msra.mxu0 0.0
  %490 = vmatprep.subr.mxu0 0.0
  %491 = vmatpush2.msra.mxu0 0.0
  %492 = vmatprep.subr.mxu0 0.0
  %493 = vmatpush2.msra.mxu0 0.0
  %494 = vmatprep.subr.mxu0 0.0
  %495 = vmatpush2.msra.mxu0 0.0
  %496 = vmatprep.subr.mxu0 0.0
  %497 = vmatpush2.msra.mxu0 0.0
  %498 = vmatprep.subr.mxu0 0.0
  %499 = vmatpush2.msra.mxu0 0.0
  %500 = vmatprep.subr.mxu0 0.0
  %501 = vmatpush2.msra.mxu0 0.0
  %502 = vmatprep.subr.mxu0 0.0
  %503 = vmatpush2.msra.mxu0 0.0
  %504 = vmatprep.subr.mxu0 0.0
  %505 = vmatpush2.msra.mxu0 0.0
  %506 = vmatprep.subr.mxu0 0.0
  %507 = vmatpush2.msra.mxu0 0.0
  %508 = vmatprep.subr.mxu0 0.0
  %509 = vmatpush2.msra.mxu0 0.0
  %510 = vmatprep.subr.mxu0 0.0
  %511 = vmatpush2.msra.mxu0 0.0
  %512 = vmatprep.subr.mxu0 0.0
  %513 = vmatpush2.msra.mxu0 0.0
  %514 = vmatprep.mubr.f32.mxu0 0.0
  %515 = vmatmul.mubr.f32.gmra.mxu0 %v377
  %v516 = vpop.f32.mrf.mxu0
  %v517 = vadd.f32 %v373, %v516
  %v518 = vpop.f32.mrf.mxu0
  %v519 = vadd.f32 %v373, %v518
  %520 = vdwg.mxu0
  %v521 = vmax.f32 %v446, 0.0
  %v522 = vmax.f32 %v448, 0.0
  %v523 = vmax.f32 %v517, 0.0
  %v524 = vmax.f32 %v519, 0.0
  %525 = vst [vmem:[#allocation3] sm:$0xff] %v521
  %526 = vst [vmem:[#allocation3 + $0x8] sm:$0xff] %v522
  %527 = vst [vmem:[#allocation3 + $0x10] sm:$0xff] %v523
  %528 = vst [vmem:[#allocation3 + $0x18] sm:$0xff] %v524
  %v529 = vld [vmem:[#allocation3] sm:$0xff]
  %v530 = vld [vmem:[#allocation3 + $0x8] sm:$0xff]
  %v531 = vld [vmem:[#allocation3 + $0x10] sm:$0xff]
  %v532 = vld [vmem:[#allocation3 + $0x18] sm:$0xff]
  %533 = vst [vmem:[#allocation5] sm:$0xff] %v529
  %534 = vst [vmem:[#allocation5 + $0x8] sm:$0xff] %v530
  %535 = vst [vmem:[#allocation5 + $0x10] sm:$0xff] %v531
  %536 = vst [vmem:[#allocation5 + $0x18] sm:$0xff] %v532
  %v537 = vld [vmem:[#allocation3] sm:$0xff]
  %v538 = vld [vmem:[#allocation3 + $0x8] sm:$0xff]
  %v539 = vld [vmem:[#allocation3 + $0x10] sm:$0xff]
  %v540 = vld [vmem:[#allocation3 + $0x18] sm:$0xff]
  %v541 = vld [vmem:[#allocation3 + $0x20] sm:$0xff]
  %547 = vrot.lane.b32.xlu0 %v537, 127
  %v548 = vpop.permute.xlu0 %547
  %549 = vrot.lane.b32.xlu0 %v538, 127
  %v550 = vpop.permute.xlu0 %549
  %551 = vrot.lane.b32.xlu0 %v539, 127
  %v552 = vpop.permute.xlu0 %551
  %553 = vrot.lane.b32.xlu0 %v540, 127
  %v554 = vpop.permute.xlu0 %553
  %555 = vrot.lane.b32.xlu0 %v541, 127
  %v556 = vpop.permute.xlu0 %555
  %v557 = vsel %vm102, %v548, %v550
  %v558 = vsel %vm102, %v550, %v552
  %v559 = vsel %vm102, %v552, %v554
  %v560 = vsel %vm102, %v554, %v556
  %565 = vst [vmem:[#allocation5 + $0x20] sm:$0xff] %v557
  %566 = vst [vmem:[#allocation5 + $0x28] sm:$0xff] %v558
  %567 = vst [vmem:[#allocation5 + $0x30] sm:$0xff] %v559
  %568 = vst [vmem:[#allocation5 + $0x38] sm:$0xff] %v560
  %v569 = vld [vmem:[#allocation3] sm:$0xff]
  %v570 = vld [vmem:[#allocation3 + $0x8] sm:$0xff]
  %v571 = vld [vmem:[#allocation3 + $0x10] sm:$0xff]
  %v572 = vld [vmem:[#allocation3 + $0x18] sm:$0xff]
  %v573 = vld [vmem:[#allocation3 + $0x20] sm:$0xff]
  %579 = vrot.lane.b32.xlu0 %v569, 126
  %v580 = vpop.permute.xlu0 %579
  %581 = vrot.lane.b32.xlu0 %v570, 126
  %v582 = vpop.permute.xlu0 %581
  %583 = vrot.lane.b32.xlu0 %v571, 126
  %v584 = vpop.permute.xlu0 %583
  %585 = vrot.lane.b32.xlu0 %v572, 126
  %v586 = vpop.permute.xlu0 %585
  %587 = vrot.lane.b32.xlu0 %v573, 126
  %v588 = vpop.permute.xlu0 %587
  %v589 = vsel %vm133, %v580, %v582
  %v590 = vsel %vm133, %v582, %v584
  %v591 = vsel %vm133, %v584, %v586
  %v592 = vsel %vm133, %v586, %v588
  %597 = vst [vmem:[#allocation5 + $0x40] sm:$0xff] %v589
  %598 = vst [vmem:[#allocation5 + $0x48] sm:$0xff] %v590
  %599 = vst [vmem:[#allocation5 + $0x50] sm:$0xff] %v591
  %600 = vst [vmem:[#allocation5 + $0x58] sm:$0xff] %v592
  %v601 = vld [vmem:[#allocation3] sm:$0xff]
  %v602 = vld [vmem:[#allocation3 + $0x8] sm:$0xff]
  %v603 = vld [vmem:[#allocation3 + $0x10] sm:$0xff]
  %v604 = vld [vmem:[#allocation3 + $0x18] sm:$0xff]
  %v605 = vld [vmem:[#allocation3 + $0x20] sm:$0xff]
  %611 = vrot.lane.b32.xlu0 %v601, 112
  %v612 = vpop.permute.xlu0 %611
  %613 = vrot.lane.b32.xlu0 %v602, 112
  %v614 = vpop.permute.xlu0 %613
  %615 = vrot.lane.b32.xlu0 %v603, 112
  %v616 = vpop.permute.xlu0 %615
  %617 = vrot.lane.b32.xlu0 %v604, 112
  %v618 = vpop.permute.xlu0 %617
  %619 = vrot.lane.b32.xlu0 %v605, 112
  %v620 = vpop.permute.xlu0 %619
  %v621 = vsel %vm164, %v612, %v614
  %v622 = vsel %vm164, %v614, %v616
  %v623 = vsel %vm164, %v616, %v618
  %v624 = vsel %vm164, %v618, %v620
  %629 = vst [vmem:[#allocation5 + $0x60] sm:$0xff] %v621
  %630 = vst [vmem:[#allocation5 + $0x68] sm:$0xff] %v622
  %631 = vst [vmem:[#allocation5 + $0x70] sm:$0xff] %v623
  %632 = vst [vmem:[#allocation5 + $0x78] sm:$0xff] %v624
  %v633 = vld [vmem:[#allocation3] sm:$0xff]
  %v634 = vld [vmem:[#allocation3 + $0x8] sm:$0xff]
  %v635 = vld [vmem:[#allocation3 + $0x10] sm:$0xff]
  %v636 = vld [vmem:[#allocation3 + $0x18] sm:$0xff]
  %v637 = vld [vmem:[#allocation3 + $0x20] sm:$0xff]
  %643 = vrot.lane.b32.xlu0 %v633, 111
  %v644 = vpop.permute.xlu0 %643
  %645 = vrot.lane.b32.xlu0 %v634, 111
  %v646 = vpop.permute.xlu0 %645
  %647 = vrot.lane.b32.xlu0 %v635, 111
  %v648 = vpop.permute.xlu0 %647
  %649 = vrot.lane.b32.xlu0 %v636, 111
  %v650 = vpop.permute.xlu0 %649
  %651 = vrot.lane.b32.xlu0 %v637, 111
  %v652 = vpop.permute.xlu0 %651
  %v653 = vsel %vm195, %v644, %v646
  %v654 = vsel %vm195, %v646, %v648
  %v655 = vsel %vm195, %v648, %v650
  %v656 = vsel %vm195, %v650, %v652
  %661 = vst [vmem:[#allocation5 + $0x80] sm:$0xff] %v653
  %662 = vst [vmem:[#allocation5 + $0x88] sm:$0xff] %v654
  %663 = vst [vmem:[#allocation5 + $0x90] sm:$0xff] %v655
  %664 = vst [vmem:[#allocation5 + $0x98] sm:$0xff] %v656
  %v665 = vld [vmem:[#allocation3] sm:$0xff]
  %v666 = vld [vmem:[#allocation3 + $0x8] sm:$0xff]
  %v667 = vld [vmem:[#allocation3 + $0x10] sm:$0xff]
  %v668 = vld [vmem:[#allocation3 + $0x18] sm:$0xff]
  %v669 = vld [vmem:[#allocation3 + $0x20] sm:$0xff]
  %675 = vrot.lane.b32.xlu0 %v665, 110
  %v676 = vpop.permute.xlu0 %675
  %677 = vrot.lane.b32.xlu0 %v666, 110
  %v678 = vpop.permute.xlu0 %677
  %679 = vrot.lane.b32.xlu0 %v667, 110
  %v680 = vpop.permute.xlu0 %679
  %681 = vrot.lane.b32.xlu0 %v668, 110
  %v682 = vpop.permute.xlu0 %681
  %683 = vrot.lane.b32.xlu0 %v669, 110
  %v684 = vpop.permute.xlu0 %683
  %v685 = vsel %vm226, %v676, %v678
  %v686 = vsel %vm226, %v678, %v680
  %v687 = vsel %vm226, %v680, %v682
  %v688 = vsel %vm226, %v682, %v684
  %693 = vst [vmem:[#allocation5 + $0xa0] sm:$0xff] %v685
  %694 = vst [vmem:[#allocation5 + $0xa8] sm:$0xff] %v686
  %695 = vst [vmem:[#allocation5 + $0xb0] sm:$0xff] %v687
  %696 = vst [vmem:[#allocation5 + $0xb8] sm:$0xff] %v688
  %v697 = vld [vmem:[#allocation3] sm:$0xff]
  %v698 = vld [vmem:[#allocation3 + $0x8] sm:$0xff]
  %v699 = vld [vmem:[#allocation3 + $0x10] sm:$0xff]
  %v700 = vld [vmem:[#allocation3 + $0x18] sm:$0xff]
  %v701 = vld [vmem:[#allocation3 + $0x20] sm:$0xff]
  %707 = vrot.lane.b32.xlu0 %v697, 96
  %v708 = vpop.permute.xlu0 %707
  %709 = vrot.lane.b32.xlu0 %v698, 96
  %v710 = vpop.permute.xlu0 %709
  %711 = vrot.lane.b32.xlu0 %v699, 96
  %v712 = vpop.permute.xlu0 %711
  %713 = vrot.lane.b32.xlu0 %v700, 96
  %v714 = vpop.permute.xlu0 %713
  %715 = vrot.lane.b32.xlu0 %v701, 96
  %v716 = vpop.permute.xlu0 %715
  %v717 = vsel %vm257, %v708, %v710
  %v718 = vsel %vm257, %v710, %v712
  %v719 = vsel %vm257, %v712, %v714
  %v720 = vsel %vm257, %v714, %v716
  %725 = vst [vmem:[#allocation5 + $0xc0] sm:$0xff] %v717
  %726 = vst [vmem:[#allocation5 + $0xc8] sm:$0xff] %v718
  %727 = vst [vmem:[#allocation5 + $0xd0] sm:$0xff] %v719
  %728 = vst [vmem:[#allocation5 + $0xd8] sm:$0xff] %v720
  %v729 = vld [vmem:[#allocation3] sm:$0xff]
  %v730 = vld [vmem:[#allocation3 + $0x8] sm:$0xff]
  %v731 = vld [vmem:[#allocation3 + $0x10] sm:$0xff]
  %v732 = vld [vmem:[#allocation3 + $0x18] sm:$0xff]
  %v733 = vld [vmem:[#allocation3 + $0x20] sm:$0xff]
  %739 = vrot.lane.b32.xlu0 %v729, 95
  %v740 = vpop.permute.xlu0 %739
  %741 = vrot.lane.b32.xlu0 %v730, 95
  %v742 = vpop.permute.xlu0 %741
  %743 = vrot.lane.b32.xlu0 %v731, 95
  %v744 = vpop.permute.xlu0 %743
  %745 = vrot.lane.b32.xlu0 %v732, 95
  %v746 = vpop.permute.xlu0 %745
  %747 = vrot.lane.b32.xlu0 %v733, 95
  %v748 = vpop.permute.xlu0 %747
  %v749 = vsel %vm288, %v740, %v742
  %v750 = vsel %vm288, %v742, %v744
  %v751 = vsel %vm288, %v744, %v746
  %v752 = vsel %vm288, %v746, %v748
  %757 = vst [vmem:[#allocation5 + $0xe0] sm:$0xff] %v749
  %758 = vst [vmem:[#allocation5 + $0xe8] sm:$0xff] %v750
  %759 = vst [vmem:[#allocation5 + $0xf0] sm:$0xff] %v751
  %760 = vst [vmem:[#allocation5 + $0xf8] sm:$0xff] %v752
  %v761 = vld [vmem:[#allocation3] sm:$0xff]
  %v762 = vld [vmem:[#allocation3 + $0x8] sm:$0xff]
  %v763 = vld [vmem:[#allocation3 + $0x10] sm:$0xff]
  %v764 = vld [vmem:[#allocation3 + $0x18] sm:$0xff]
  %v765 = vld [vmem:[#allocation3 + $0x20] sm:$0xff]
  %771 = vrot.lane.b32.xlu0 %v761, 94
  %v772 = vpop.permute.xlu0 %771
  %773 = vrot.lane.b32.xlu0 %v762, 94
  %v774 = vpop.permute.xlu0 %773
  %775 = vrot.lane.b32.xlu0 %v763, 94
  %v776 = vpop.permute.xlu0 %775
  %777 = vrot.lane.b32.xlu0 %v764, 94
  %v778 = vpop.permute.xlu0 %777
  %779 = vrot.lane.b32.xlu0 %v765, 94
  %v780 = vpop.permute.xlu0 %779
  %v781 = vsel %vm319, %v772, %v774
  %v782 = vsel %vm319, %v774, %v776
  %v783 = vsel %vm319, %v776, %v778
  %v784 = vsel %vm319, %v778, %v780
  %789 = vst [vmem:[#allocation5 + $0x100] sm:$0xff] %v781
  %790 = vst [vmem:[#allocation5 + $0x108] sm:$0xff] %v782
  %791 = vst [vmem:[#allocation5 + $0x110] sm:$0xff] %v783
  %792 = vst [vmem:[#allocation5 + $0x118] sm:$0xff] %v784
  %v793 = vld [vmem:[%s3] sm:$0xff]
  %v794 = vld [vmem:[#allocation5] sm:$0xff]
  %v795 = vld [vmem:[#allocation5 + $0x8] sm:$0xff]
  %v796 = vld [vmem:[#allocation5 + $0x10] sm:$0xff]
  %v797 = vld [vmem:[#allocation5 + $0x18] sm:$0xff]
  %v798 = vld [vmem:[#allocation5 + $0x20] sm:$0xff]
  %v799 = vld [vmem:[#allocation5 + $0x28] sm:$0xff]
  %v800 = vld [vmem:[#allocation5 + $0x30] sm:$0xff]
  %v801 = vld [vmem:[#allocation5 + $0x38] sm:$0xff]
  %v802 = vld [vmem:[#allocation5 + $0x40] sm:$0xff]
  %v803 = vld [vmem:[#allocation5 + $0x48] sm:$0xff]
  %v804 = vld [vmem:[#allocation5 + $0x50] sm:$0xff]
  %v805 = vld [vmem:[#allocation5 + $0x58] sm:$0xff]
  %v806 = vld [vmem:[#allocation5 + $0x60] sm:$0xff]
  %v807 = vld [vmem:[#allocation5 + $0x68] sm:$0xff]
  %v808 = vld [vmem:[#allocation5 + $0x70] sm:$0xff]
  %v809 = vld [vmem:[#allocation5 + $0x78] sm:$0xff]
  %v810 = vld [vmem:[#allocation5 + $0x80] sm:$0xff]
  %v811 = vld [vmem:[#allocation5 + $0x88] sm:$0xff]
  %v812 = vld [vmem:[#allocation5 + $0x90] sm:$0xff]
  %v813 = vld [vmem:[#allocation5 + $0x98] sm:$0xff]
  %v814 = vld [vmem:[#allocation5 + $0xa0] sm:$0xff]
  %v815 = vld [vmem:[#allocation5 + $0xa8] sm:$0xff]
  %v816 = vld [vmem:[#allocation5 + $0xb0] sm:$0xff]
  %v817 = vld [vmem:[#allocation5 + $0xb8] sm:$0xff]
  %v818 = vld [vmem:[#allocation5 + $0xc0] sm:$0xff]
  %v819 = vld [vmem:[#allocation5 + $0xc8] sm:$0xff]
  %v820 = vld [vmem:[#allocation5 + $0xd0] sm:$0xff]
  %v821 = vld [vmem:[#allocation5 + $0xd8] sm:$0xff]
  %v822 = vld [vmem:[#allocation5 + $0xe0] sm:$0xff]
  %v823 = vld [vmem:[#allocation5 + $0xe8] sm:$0xff]
  %v824 = vld [vmem:[#allocation5 + $0xf0] sm:$0xff]
  %v825 = vld [vmem:[#allocation5 + $0xf8] sm:$0xff]
  %v826 = vld [vmem:[#allocation5 + $0x100] sm:$0xff]
  %v827 = vld [vmem:[#allocation5 + $0x108] sm:$0xff]
  %v828 = vld [vmem:[#allocation5 + $0x110] sm:$0xff]
  %v829 = vld [vmem:[#allocation5 + $0x118] sm:$0xff]
  %v830 = vld [vmem:[%s4] sm:$0xff]
  %832 = vset.pattern.permute.xlu0 0
  %833 = vperm.xlu0 %832, %v830
  %v834 = vpop.permute.xlu0 %833
  %v837 = vsel %vm375, %v793, 0
  %839 = vmatprep.subr.mxu0 0.0
  %840 = vmatpush1.msra.mxu0 0.0
  %841 = vmatprep.subr.mxu0 0.0
  %842 = vmatpush1.msra.mxu0 0.0
  %843 = vmatprep.subr.mxu0 0.0
  %844 = vmatpush1.msra.mxu0 0.0
  %845 = vmatprep.subr.mxu0 0.0
  %846 = vmatpush1.msra.mxu0 0.0
  %847 = vmatprep.subr.mxu0 0.0
  %848 = vmatpush1.msra.mxu0 0.0
  %849 = vmatprep.subr.mxu0 0.0
  %850 = vmatpush1.msra.mxu0 0.0
  %851 = vmatprep.subr.mxu0 0.0
  %852 = vmatpush1.msra.mxu0 0.0
  %853 = vmatprep.subr.mxu0 %v827
  %854 = vmatpush1.msra.mxu0 %v826
  %855 = vmatprep.subr.mxu0 %v823
  %856 = vmatpush1.msra.mxu0 %v822
  %857 = vmatprep.subr.mxu0 %v819
  %858 = vmatpush1.msra.mxu0 %v818
  %859 = vmatprep.subr.mxu0 %v815
  %860 = vmatpush1.msra.mxu0 %v814
  %861 = vmatprep.subr.mxu0 %v811
  %862 = vmatpush1.msra.mxu0 %v810
  %863 = vmatprep.subr.mxu0 %v807
  %864 = vmatpush1.msra.mxu0 %v806
  %865 = vmatprep.subr.mxu0 %v803
  %866 = vmatpush1.msra.mxu0 %v802
  %867 = vmatprep.subr.mxu0 %v799
  %868 = vmatpush1.msra.mxu0 %v798
  %869 = vmatprep.subr.mxu0 %v795
  %870 = vmatpush1.msra.mxu0 %v794
  %871 = vmatprep.subr.mxu0 0.0
  %872 = vmatpush2.msra.mxu0 0.0
  %873 = vmatprep.subr.mxu0 0.0
  %874 = vmatpush2.msra.mxu0 0.0
  %875 = vmatprep.subr.mxu0 0.0
  %876 = vmatpush2.msra.mxu0 0.0
  %877 = vmatprep.subr.mxu0 0.0
  %878 = vmatpush2.msra.mxu0 0.0
  %879 = vmatprep.subr.mxu0 0.0
  %880 = vmatpush2.msra.mxu0 0.0
  %881 = vmatprep.subr.mxu0 0.0
  %882 = vmatpush2.msra.mxu0 0.0
  %883 = vmatprep.subr.mxu0 0.0
  %884 = vmatpush2.msra.mxu0 0.0
  %885 = vmatprep.subr.mxu0 0.0
  %886 = vmatpush2.msra.mxu0 0.0
  %887 = vmatprep.subr.mxu0 0.0
  %888 = vmatpush2.msra.mxu0 0.0
  %889 = vmatprep.subr.mxu0 0.0
  %890 = vmatpush2.msra.mxu0 0.0
  %891 = vmatprep.subr.mxu0 0.0
  %892 = vmatpush2.msra.mxu0 0.0
  %893 = vmatprep.subr.mxu0 0.0
  %894 = vmatpush2.msra.mxu0 0.0
  %895 = vmatprep.subr.mxu0 0.0
  %896 = vmatpush2.msra.mxu0 0.0
  %897 = vmatprep.subr.mxu0 0.0
  %898 = vmatpush2.msra.mxu0 0.0
  %899 = vmatprep.subr.mxu0 0.0
  %900 = vmatpush2.msra.mxu0 0.0
  %901 = vmatprep.subr.mxu0 0.0
  %902 = vmatpush2.msra.mxu0 0.0
  %903 = vmatprep.mubr.f32.mxu0 0.0
  %904 = vmatmul.mubr.f32.gmra.mxu0 %v837
  %v905 = vpop.f32.mrf.mxu0
  %v906 = vadd.f32 %v834, %v905
  %v907 = vpop.f32.mrf.mxu0
  %v908 = vadd.f32 %v834, %v907
  %909 = vdwg.mxu0
  %910 = vmatprep.subr.mxu0 0.0
  %911 = vmatpush1.msra.mxu0 0.0
  %912 = vmatprep.subr.mxu0 0.0
  %913 = vmatpush1.msra.mxu0 0.0
  %914 = vmatprep.subr.mxu0 0.0
  %915 = vmatpush1.msra.mxu0 0.0
  %916 = vmatprep.subr.mxu0 0.0
  %917 = vmatpush1.msra.mxu0 0.0
  %918 = vmatprep.subr.mxu0 0.0
  %919 = vmatpush1.msra.mxu0 0.0
  %920 = vmatprep.subr.mxu0 0.0
  %921 = vmatpush1.msra.mxu0 0.0
  %922 = vmatprep.subr.mxu0 0.0
  %923 = vmatpush1.msra.mxu0 0.0
  %924 = vmatprep.subr.mxu0 %v829
  %925 = vmatpush1.msra.mxu0 %v828
  %926 = vmatprep.subr.mxu0 %v825
  %927 = vmatpush1.msra.mxu0 %v824
  %928 = vmatprep.subr.mxu0 %v821
  %929 = vmatpush1.msra.mxu0 %v820
  %930 = vmatprep.subr.mxu0 %v817
  %931 = vmatpush1.msra.mxu0 %v816
  %932 = vmatprep.subr.mxu0 %v813
  %933 = vmatpush1.msra.mxu0 %v812
  %934 = vmatprep.subr.mxu0 %v809
  %935 = vmatpush1.msra.mxu0 %v808
  %936 = vmatprep.subr.mxu0 %v805
  %937 = vmatpush1.msra.mxu0 %v804
  %938 = vmatprep.subr.mxu0 %v801
  %939 = vmatpush1.msra.mxu0 %v800
  %940 = vmatprep.subr.mxu0 %v797
  %941 = vmatpush1.msra.mxu0 %v796
  %942 = vmatprep.subr.mxu0 0.0
  %943 = vmatpush2.msra.mxu0 0.0
  %944 = vmatprep.subr.mxu0 0.0
  %945 = vmatpush2.msra.mxu0 0.0
  %946 = vmatprep.subr.mxu0 0.0
  %947 = vmatpush2.msra.mxu0 0.0
  %948 = vmatprep.subr.mxu0 0.0
  %949 = vmatpush2.msra.mxu0 0.0
  %950 = vmatprep.subr.mxu0 0.0
  %951 = vmatpush2.msra.mxu0 0.0
  %952 = vmatprep.subr.mxu0 0.0
  %953 = vmatpush2.msra.mxu0 0.0
  %954 = vmatprep.subr.mxu0 0.0
  %955 = vmatpush2.msra.mxu0 0.0
  %956 = vmatprep.subr.mxu0 0.0
  %957 = vmatpush2.msra.mxu0 0.0
  %958 = vmatprep.subr.mxu0 0.0
  %959 = vmatpush2.msra.mxu0 0.0
  %960 = vmatprep.subr.mxu0 0.0
  %961 = vmatpush2.msra.mxu0 0.0
  %962 = vmatprep.subr.mxu0 0.0
  %963 = vmatpush2.msra.mxu0 0.0
  %964 = vmatprep.subr.mxu0 0.0
  %965 = vmatpush2.msra.mxu0 0.0
  %966 = vmatprep.subr.mxu0 0.0
  %967 = vmatpush2.msra.mxu0 0.0
  %968 = vmatprep.subr.mxu0 0.0
  %969 = vmatpush2.msra.mxu0 0.0
  %970 = vmatprep.subr.mxu0 0.0
  %971 = vmatpush2.msra.mxu0 0.0
  %972 = vmatprep.subr.mxu0 0.0
  %973 = vmatpush2.msra.mxu0 0.0
  %974 = vmatprep.mubr.f32.mxu0 0.0
  %975 = vmatmul.mubr.f32.gmra.mxu0 %v837
  %v976 = vpop.f32.mrf.mxu0
  %v977 = vadd.f32 %v834, %v976
  %v978 = vpop.f32.mrf.mxu0
  %v979 = vadd.f32 %v834, %v978
  %980 = vdwg.mxu0
  %v981 = vmax.f32 %v906, 0.0
  %v982 = vmax.f32 %v908, 0.0
  %v983 = vmax.f32 %v977, 0.0
  %v984 = vmax.f32 %v979, 0.0
  %985 = vst [vmem:[#allocation4] sm:$0xff] %v981
  %986 = vst [vmem:[#allocation4 + $0x8] sm:$0xff] %v982
  %987 = vst [vmem:[#allocation4 + $0x10] sm:$0xff] %v983
  %988 = vst [vmem:[#allocation4 + $0x18] sm:$0xff] %v984
  %v989 = vld [vmem:[#allocation4] sm:$0xff]
  %v990 = vld [vmem:[#allocation4 + $0x8] sm:$0xff]
  %v991 = vld [vmem:[#allocation4 + $0x10] sm:$0xff]
  %v992 = vld [vmem:[#allocation4 + $0x18] sm:$0xff]
  %993 = vst [vmem:[#allocation5] sm:$0xff] %v989
  %994 = vst [vmem:[#allocation5 + $0x8] sm:$0xff] %v990
  %995 = vst [vmem:[#allocation5 + $0x10] sm:$0xff] %v991
  %996 = vst [vmem:[#allocation5 + $0x18] sm:$0xff] %v992
  %v997 = vld [vmem:[#allocation4] sm:$0xff]
  %v998 = vld [vmem:[#allocation4 + $0x8] sm:$0xff]
  %v999 = vld [vmem:[#allocation4 + $0x10] sm:$0xff]
  %v1000 = vld [vmem:[#allocation4 + $0x18] sm:$0xff]
  %v1001 = vld [vmem:[#allocation4 + $0x20] sm:$0xff]
  %1007 = vrot.lane.b32.xlu0 %v997, 127
  %v1008 = vpop.permute.xlu0 %1007
  %1009 = vrot.lane.b32.xlu0 %v998, 127
  %v1010 = vpop.permute.xlu0 %1009
  %1011 = vrot.lane.b32.xlu0 %v999, 127
  %v1012 = vpop.permute.xlu0 %1011
  %1013 = vrot.lane.b32.xlu0 %v1000, 127
  %v1014 = vpop.permute.xlu0 %1013
  %1015 = vrot.lane.b32.xlu0 %v1001, 127
  %v1016 = vpop.permute.xlu0 %1015
  %v1017 = vsel %vm102, %v1008, %v1010
  %v1018 = vsel %vm102, %v1010, %v1012
  %v1019 = vsel %vm102, %v1012, %v1014
  %v1020 = vsel %vm102, %v1014, %v1016
  %1025 = vst [vmem:[#allocation5 + $0x20] sm:$0xff] %v1017
  %1026 = vst [vmem:[#allocation5 + $0x28] sm:$0xff] %v1018
  %1027 = vst [vmem:[#allocation5 + $0x30] sm:$0xff] %v1019
  %1028 = vst [vmem:[#allocation5 + $0x38] sm:$0xff] %v1020
  %v1029 = vld [vmem:[#allocation4] sm:$0xff]
  %v1030 = vld [vmem:[#allocation4 + $0x8] sm:$0xff]
  %v1031 = vld [vmem:[#allocation4 + $0x10] sm:$0xff]
  %v1032 = vld [vmem:[#allocation4 + $0x18] sm:$0xff]
  %v1033 = vld [vmem:[#allocation4 + $0x20] sm:$0xff]
  %1039 = vrot.lane.b32.xlu0 %v1029, 126
  %v1040 = vpop.permute.xlu0 %1039
  %1041 = vrot.lane.b32.xlu0 %v1030, 126
  %v1042 = vpop.permute.xlu0 %1041
  %1043 = vrot.lane.b32.xlu0 %v1031, 126
  %v1044 = vpop.permute.xlu0 %1043
  %1045 = vrot.lane.b32.xlu0 %v1032, 126
  %v1046 = vpop.permute.xlu0 %1045
  %1047 = vrot.lane.b32.xlu0 %v1033, 126
  %v1048 = vpop.permute.xlu0 %1047
  %v1049 = vsel %vm133, %v1040, %v1042
  %v1050 = vsel %vm133, %v1042, %v1044
  %v1051 = vsel %vm133, %v1044, %v1046
  %v1052 = vsel %vm133, %v1046, %v1048
  %1057 = vst [vmem:[#allocation5 + $0x40] sm:$0xff] %v1049
  %1058 = vst [vmem:[#allocation5 + $0x48] sm:$0xff] %v1050
  %1059 = vst [vmem:[#allocation5 + $0x50] sm:$0xff] %v1051
  %1060 = vst [vmem:[#allocation5 + $0x58] sm:$0xff] %v1052
  %v1061 = vld [vmem:[#allocation4] sm:$0xff]
  %v1062 = vld [vmem:[#allocation4 + $0x8] sm:$0xff]
  %v1063 = vld [vmem:[#allocation4 + $0x10] sm:$0xff]
  %v1064 = vld [vmem:[#allocation4 + $0x18] sm:$0xff]
  %v1065 = vld [vmem:[#allocation4 + $0x20] sm:$0xff]
  %1071 = vrot.lane.b32.xlu0 %v1061, 112
  %v1072 = vpop.permute.xlu0 %1071
  %1073 = vrot.lane.b32.xlu0 %v1062, 112
  %v1074 = vpop.permute.xlu0 %1073
  %1075 = vrot.lane.b32.xlu0 %v1063, 112
  %v1076 = vpop.permute.xlu0 %1075
  %1077 = vrot.lane.b32.xlu0 %v1064, 112
  %v1078 = vpop.permute.xlu0 %1077
  %1079 = vrot.lane.b32.xlu0 %v1065, 112
  %v1080 = vpop.permute.xlu0 %1079
  %v1081 = vsel %vm164, %v1072, %v1074
  %v1082 = vsel %vm164, %v1074, %v1076
  %v1083 = vsel %vm164, %v1076, %v1078
  %v1084 = vsel %vm164, %v1078, %v1080
  %1089 = vst [vmem:[#allocation5 + $0x60] sm:$0xff] %v1081
  %1090 = vst [vmem:[#allocation5 + $0x68] sm:$0xff] %v1082
  %1091 = vst [vmem:[#allocation5 + $0x70] sm:$0xff] %v1083
  %1092 = vst [vmem:[#allocation5 + $0x78] sm:$0xff] %v1084
  %v1093 = vld [vmem:[#allocation4] sm:$0xff]
  %v1094 = vld [vmem:[#allocation4 + $0x8] sm:$0xff]
  %v1095 = vld [vmem:[#allocation4 + $0x10] sm:$0xff]
  %v1096 = vld [vmem:[#allocation4 + $0x18] sm:$0xff]
  %v1097 = vld [vmem:[#allocation4 + $0x20] sm:$0xff]
  %1103 = vrot.lane.b32.xlu0 %v1093, 111
  %v1104 = vpop.permute.xlu0 %1103
  %1105 = vrot.lane.b32.xlu0 %v1094, 111
  %v1106 = vpop.permute.xlu0 %1105
  %1107 = vrot.lane.b32.xlu0 %v1095, 111
  %v1108 = vpop.permute.xlu0 %1107
  %1109 = vrot.lane.b32.xlu0 %v1096, 111
  %v1110 = vpop.permute.xlu0 %1109
  %1111 = vrot.lane.b32.xlu0 %v1097, 111
  %v1112 = vpop.permute.xlu0 %1111
  %v1113 = vsel %vm195, %v1104, %v1106
  %v1114 = vsel %vm195, %v1106, %v1108
  %v1115 = vsel %vm195, %v1108, %v1110
  %v1116 = vsel %vm195, %v1110, %v1112
  %1121 = vst [vmem:[#allocation5 + $0x80] sm:$0xff] %v1113
  %1122 = vst [vmem:[#allocation5 + $0x88] sm:$0xff] %v1114
  %1123 = vst [vmem:[#allocation5 + $0x90] sm:$0xff] %v1115
  %1124 = vst [vmem:[#allocation5 + $0x98] sm:$0xff] %v1116
  %v1125 = vld [vmem:[#allocation4] sm:$0xff]
  %v1126 = vld [vmem:[#allocation4 + $0x8] sm:$0xff]
  %v1127 = vld [vmem:[#allocation4 + $0x10] sm:$0xff]
  %v1128 = vld [vmem:[#allocation4 + $0x18] sm:$0xff]
  %v1129 = vld [vmem:[#allocation4 + $0x20] sm:$0xff]
  %1135 = vrot.lane.b32.xlu0 %v1125, 110
  %v1136 = vpop.permute.xlu0 %1135
  %1137 = vrot.lane.b32.xlu0 %v1126, 110
  %v1138 = vpop.permute.xlu0 %1137
  %1139 = vrot.lane.b32.xlu0 %v1127, 110
  %v1140 = vpop.permute.xlu0 %1139
  %1141 = vrot.lane.b32.xlu0 %v1128, 110
  %v1142 = vpop.permute.xlu0 %1141
  %1143 = vrot.lane.b32.xlu0 %v1129, 110
  %v1144 = vpop.permute.xlu0 %1143
  %v1145 = vsel %vm226, %v1136, %v1138
  %v1146 = vsel %vm226, %v1138, %v1140
  %v1147 = vsel %vm226, %v1140, %v1142
  %v1148 = vsel %vm226, %v1142, %v1144
  %1153 = vst [vmem:[#allocation5 + $0xa0] sm:$0xff] %v1145
  %1154 = vst [vmem:[#allocation5 + $0xa8] sm:$0xff] %v1146
  %1155 = vst [vmem:[#allocation5 + $0xb0] sm:$0xff] %v1147
  %1156 = vst [vmem:[#allocation5 + $0xb8] sm:$0xff] %v1148
  %v1157 = vld [vmem:[#allocation4] sm:$0xff]
  %v1158 = vld [vmem:[#allocation4 + $0x8] sm:$0xff]
  %v1159 = vld [vmem:[#allocation4 + $0x10] sm:$0xff]
  %v1160 = vld [vmem:[#allocation4 + $0x18] sm:$0xff]
  %v1161 = vld [vmem:[#allocation4 + $0x20] sm:$0xff]
  %1167 = vrot.lane.b32.xlu0 %v1157, 96
  %v1168 = vpop.permute.xlu0 %1167
  %1169 = vrot.lane.b32.xlu0 %v1158, 96
  %v1170 = vpop.permute.xlu0 %1169
  %1171 = vrot.lane.b32.xlu0 %v1159, 96
  %v1172 = vpop.permute.xlu0 %1171
  %1173 = vrot.lane.b32.xlu0 %v1160, 96
  %v1174 = vpop.permute.xlu0 %1173
  %1175 = vrot.lane.b32.xlu0 %v1161, 96
  %v1176 = vpop.permute.xlu0 %1175
  %v1177 = vsel %vm257, %v1168, %v1170
  %v1178 = vsel %vm257, %v1170, %v1172
  %v1179 = vsel %vm257, %v1172, %v1174
  %v1180 = vsel %vm257, %v1174, %v1176
  %1185 = vst [vmem:[#allocation5 + $0xc0] sm:$0xff] %v1177
  %1186 = vst [vmem:[#allocation5 + $0xc8] sm:$0xff] %v1178
  %1187 = vst [vmem:[#allocation5 + $0xd0] sm:$0xff] %v1179
  %1188 = vst [vmem:[#allocation5 + $0xd8] sm:$0xff] %v1180
  %v1189 = vld [vmem:[#allocation4] sm:$0xff]
  %v1190 = vld [vmem:[#allocation4 + $0x8] sm:$0xff]
  %v1191 = vld [vmem:[#allocation4 + $0x10] sm:$0xff]
  %v1192 = vld [vmem:[#allocation4 + $0x18] sm:$0xff]
  %v1193 = vld [vmem:[#allocation4 + $0x20] sm:$0xff]
  %1199 = vrot.lane.b32.xlu0 %v1189, 95
  %v1200 = vpop.permute.xlu0 %1199
  %1201 = vrot.lane.b32.xlu0 %v1190, 95
  %v1202 = vpop.permute.xlu0 %1201
  %1203 = vrot.lane.b32.xlu0 %v1191, 95
  %v1204 = vpop.permute.xlu0 %1203
  %1205 = vrot.lane.b32.xlu0 %v1192, 95
  %v1206 = vpop.permute.xlu0 %1205
  %1207 = vrot.lane.b32.xlu0 %v1193, 95
  %v1208 = vpop.permute.xlu0 %1207
  %v1209 = vsel %vm288, %v1200, %v1202
  %v1210 = vsel %vm288, %v1202, %v1204
  %v1211 = vsel %vm288, %v1204, %v1206
  %v1212 = vsel %vm288, %v1206, %v1208
  %1217 = vst [vmem:[#allocation5 + $0xe0] sm:$0xff] %v1209
  %1218 = vst [vmem:[#allocation5 + $0xe8] sm:$0xff] %v1210
  %1219 = vst [vmem:[#allocation5 + $0xf0] sm:$0xff] %v1211
  %1220 = vst [vmem:[#allocation5 + $0xf8] sm:$0xff] %v1212
  %v1221 = vld [vmem:[#allocation4] sm:$0xff]
  %v1222 = vld [vmem:[#allocation4 + $0x8] sm:$0xff]
  %v1223 = vld [vmem:[#allocation4 + $0x10] sm:$0xff]
  %v1224 = vld [vmem:[#allocation4 + $0x18] sm:$0xff]
  %v1225 = vld [vmem:[#allocation4 + $0x20] sm:$0xff]
  %1231 = vrot.lane.b32.xlu0 %v1221, 94
  %v1232 = vpop.permute.xlu0 %1231
  %1233 = vrot.lane.b32.xlu0 %v1222, 94
  %v1234 = vpop.permute.xlu0 %1233
  %1235 = vrot.lane.b32.xlu0 %v1223, 94
  %v1236 = vpop.permute.xlu0 %1235
  %1237 = vrot.lane.b32.xlu0 %v1224, 94
  %v1238 = vpop.permute.xlu0 %1237
  %1239 = vrot.lane.b32.xlu0 %v1225, 94
  %v1240 = vpop.permute.xlu0 %1239
  %v1241 = vsel %vm319, %v1232, %v1234
  %v1242 = vsel %vm319, %v1234, %v1236
  %v1243 = vsel %vm319, %v1236, %v1238
  %v1244 = vsel %vm319, %v1238, %v1240
  %1249 = vst [vmem:[#allocation5 + $0x100] sm:$0xff] %v1241
  %1250 = vst [vmem:[#allocation5 + $0x108] sm:$0xff] %v1242
  %1251 = vst [vmem:[#allocation5 + $0x110] sm:$0xff] %v1243
  %1252 = vst [vmem:[#allocation5 + $0x118] sm:$0xff] %v1244
  %v1253 = vld [vmem:[%s5] sm:$0xff]
  %v1254 = vld [vmem:[#allocation5] sm:$0xff]
  %v1255 = vld [vmem:[#allocation5 + $0x8] sm:$0xff]
  %v1256 = vld [vmem:[#allocation5 + $0x10] sm:$0xff]
  %v1257 = vld [vmem:[#allocation5 + $0x18] sm:$0xff]
  %v1258 = vld [vmem:[#allocation5 + $0x20] sm:$0xff]
  %v1259 = vld [vmem:[#allocation5 + $0x28] sm:$0xff]
  %v1260 = vld [vmem:[#allocation5 + $0x30] sm:$0xff]
  %v1261 = vld [vmem:[#allocation5 + $0x38] sm:$0xff]
  %v1262 = vld [vmem:[#allocation5 + $0x40] sm:$0xff]
  %v1263 = vld [vmem:[#allocation5 + $0x48] sm:$0xff]
  %v1264 = vld [vmem:[#allocation5 + $0x50] sm:$0xff]
  %v1265 = vld [vmem:[#allocation5 + $0x58] sm:$0xff]
  %v1266 = vld [vmem:[#allocation5 + $0x60] sm:$0xff]
  %v1267 = vld [vmem:[#allocation5 + $0x68] sm:$0xff]
  %v1268 = vld [vmem:[#allocation5 + $0x70] sm:$0xff]
  %v1269 = vld [vmem:[#allocation5 + $0x78] sm:$0xff]
  %v1270 = vld [vmem:[#allocation5 + $0x80] sm:$0xff]
  %v1271 = vld [vmem:[#allocation5 + $0x88] sm:$0xff]
  %v1272 = vld [vmem:[#allocation5 + $0x90] sm:$0xff]
  %v1273 = vld [vmem:[#allocation5 + $0x98] sm:$0xff]
  %v1274 = vld [vmem:[#allocation5 + $0xa0] sm:$0xff]
  %v1275 = vld [vmem:[#allocation5 + $0xa8] sm:$0xff]
  %v1276 = vld [vmem:[#allocation5 + $0xb0] sm:$0xff]
  %v1277 = vld [vmem:[#allocation5 + $0xb8] sm:$0xff]
  %v1278 = vld [vmem:[#allocation5 + $0xc0] sm:$0xff]
  %v1279 = vld [vmem:[#allocation5 + $0xc8] sm:$0xff]
  %v1280 = vld [vmem:[#allocation5 + $0xd0] sm:$0xff]
  %v1281 = vld [vmem:[#allocation5 + $0xd8] sm:$0xff]
  %v1282 = vld [vmem:[#allocation5 + $0xe0] sm:$0xff]
  %v1283 = vld [vmem:[#allocation5 + $0xe8] sm:$0xff]
  %v1284 = vld [vmem:[#allocation5 + $0xf0] sm:$0xff]
  %v1285 = vld [vmem:[#allocation5 + $0xf8] sm:$0xff]
  %v1286 = vld [vmem:[#allocation5 + $0x100] sm:$0xff]
  %v1287 = vld [vmem:[#allocation5 + $0x108] sm:$0xff]
  %v1288 = vld [vmem:[#allocation5 + $0x110] sm:$0xff]
  %v1289 = vld [vmem:[#allocation5 + $0x118] sm:$0xff]
  %v1290 = vld [vmem:[%s6] sm:$0xff]
  %1292 = vset.pattern.permute.xlu0 0
  %1293 = vperm.xlu0 %1292, %v1290
  %v1294 = vpop.permute.xlu0 %1293
  %v1297 = vsel %vm375, %v1253, 0
  %1299 = vmatprep.subr.mxu0 0.0
  %1300 = vmatpush1.msra.mxu0 0.0
  %1301 = vmatprep.subr.mxu0 0.0
  %1302 = vmatpush1.msra.mxu0 0.0
  %1303 = vmatprep.subr.mxu0 0.0
  %1304 = vmatpush1.msra.mxu0 0.0
  %1305 = vmatprep.subr.mxu0 0.0
  %1306 = vmatpush1.msra.mxu0 0.0
  %1307 = vmatprep.subr.mxu0 0.0
  %1308 = vmatpush1.msra.mxu0 0.0
  %1309 = vmatprep.subr.mxu0 0.0
  %1310 = vmatpush1.msra.mxu0 0.0
  %1311 = vmatprep.subr.mxu0 0.0
  %1312 = vmatpush1.msra.mxu0 0.0
  %1313 = vmatprep.subr.mxu0 %v1287
  %1314 = vmatpush1.msra.mxu0 %v1286
  %1315 = vmatprep.subr.mxu0 %v1283
  %1316 = vmatpush1.msra.mxu0 %v1282
  %1317 = vmatprep.subr.mxu0 %v1279
  %1318 = vmatpush1.msra.mxu0 %v1278
  %1319 = vmatprep.subr.mxu0 %v1275
  %1320 = vmatpush1.msra.mxu0 %v1274
  %1321 = vmatprep.subr.mxu0 %v1271
  %1322 = vmatpush1.msra.mxu0 %v1270
  %1323 = vmatprep.subr.mxu0 %v1267
  %1324 = vmatpush1.msra.mxu0 %v1266
  %1325 = vmatprep.subr.mxu0 %v1263
  %1326 = vmatpush1.msra.mxu0 %v1262
  %1327 = vmatprep.subr.mxu0 %v1259
  %1328 = vmatpush1.msra.mxu0 %v1258
  %1329 = vmatprep.subr.mxu0 %v1255
  %1330 = vmatpush1.msra.mxu0 %v1254
  %1331 = vmatprep.subr.mxu0 0.0
  %1332 = vmatpush2.msra.mxu0 0.0
  %1333 = vmatprep.subr.mxu0 0.0
  %1334 = vmatpush2.msra.mxu0 0.0
  %1335 = vmatprep.subr.mxu0 0.0
  %1336 = vmatpush2.msra.mxu0 0.0
  %1337 = vmatprep.subr.mxu0 0.0
  %1338 = vmatpush2.msra.mxu0 0.0
  %1339 = vmatprep.subr.mxu0 0.0
  %1340 = vmatpush2.msra.mxu0 0.0
  %1341 = vmatprep.subr.mxu0 0.0
  %1342 = vmatpush2.msra.mxu0 0.0
  %1343 = vmatprep.subr.mxu0 0.0
  %1344 = vmatpush2.msra.mxu0 0.0
  %1345 = vmatprep.subr.mxu0 0.0
  %1346 = vmatpush2.msra.mxu0 0.0
  %1347 = vmatprep.subr.mxu0 0.0
  %1348 = vmatpush2.msra.mxu0 0.0
  %1349 = vmatprep.subr.mxu0 0.0
  %1350 = vmatpush2.msra.mxu0 0.0
  %1351 = vmatprep.subr.mxu0 0.0
  %1352 = vmatpush2.msra.mxu0 0.0
  %1353 = vmatprep.subr.mxu0 0.0
  %1354 = vmatpush2.msra.mxu0 0.0
  %1355 = vmatprep.subr.mxu0 0.0
  %1356 = vmatpush2.msra.mxu0 0.0
  %1357 = vmatprep.subr.mxu0 0.0
  %1358 = vmatpush2.msra.mxu0 0.0
  %1359 = vmatprep.subr.mxu0 0.0
  %1360 = vmatpush2.msra.mxu0 0.0
  %1361 = vmatprep.subr.mxu0 0.0
  %1362 = vmatpush2.msra.mxu0 0.0
  %1363 = vmatprep.mubr.f32.mxu0 0.0
  %1364 = vmatmul.mubr.f32.gmra.mxu0 %v1297
  %v1365 = vpop.f32.mrf.mxu0
  %v1366 = vadd.f32 %v1294, %v1365
  %v1367 = vpop.f32.mrf.mxu0
  %v1368 = vadd.f32 %v1294, %v1367
  %1369 = vdwg.mxu0
  %1370 = vmatprep.subr.mxu0 0.0
  %1371 = vmatpush1.msra.mxu0 0.0
  %1372 = vmatprep.subr.mxu0 0.0
  %1373 = vmatpush1.msra.mxu0 0.0
  %1374 = vmatprep.subr.mxu0 0.0
  %1375 = vmatpush1.msra.mxu0 0.0
  %1376 = vmatprep.subr.mxu0 0.0
  %1377 = vmatpush1.msra.mxu0 0.0
  %1378 = vmatprep.subr.mxu0 0.0
  %1379 = vmatpush1.msra.mxu0 0.0
  %1380 = vmatprep.subr.mxu0 0.0
  %1381 = vmatpush1.msra.mxu0 0.0
  %1382 = vmatprep.subr.mxu0 0.0
  %1383 = vmatpush1.msra.mxu0 0.0
  %1384 = vmatprep.subr.mxu0 %v1289
  %1385 = vmatpush1.msra.mxu0 %v1288
  %1386 = vmatprep.subr.mxu0 %v1285
  %1387 = vmatpush1.msra.mxu0 %v1284
  %1388 = vmatprep.subr.mxu0 %v1281
  %1389 = vmatpush1.msra.mxu0 %v1280
  %1390 = vmatprep.subr.mxu0 %v1277
  %1391 = vmatpush1.msra.mxu0 %v1276
  %1392 = vmatprep.subr.mxu0 %v1273
  %1393 = vmatpush1.msra.mxu0 %v1272
  %1394 = vmatprep.subr.mxu0 %v1269
  %1395 = vmatpush1.msra.mxu0 %v1268
  %1396 = vmatprep.subr.mxu0 %v1265
  %1397 = vmatpush1.msra.mxu0 %v1264
  %1398 = vmatprep.subr.mxu0 %v1261
  %1399 = vmatpush1.msra.mxu0 %v1260
  %1400 = vmatprep.subr.mxu0 %v1257
  %1401 = vmatpush1.msra.mxu0 %v1256
  %1402 = vmatprep.subr.mxu0 0.0
  %1403 = vmatpush2.msra.mxu0 0.0
  %1404 = vmatprep.subr.mxu0 0.0
  %1405 = vmatpush2.msra.mxu0 0.0
  %1406 = vmatprep.subr.mxu0 0.0
  %1407 = vmatpush2.msra.mxu0 0.0
  %1408 = vmatprep.subr.mxu0 0.0
  %1409 = vmatpush2.msra.mxu0 0.0
  %1410 = vmatprep.subr.mxu0 0.0
  %1411 = vmatpush2.msra.mxu0 0.0
  %1412 = vmatprep.subr.mxu0 0.0
  %1413 = vmatpush2.msra.mxu0 0.0
  %1414 = vmatprep.subr.mxu0 0.0
  %1415 = vmatpush2.msra.mxu0 0.0
  %1416 = vmatprep.subr.mxu0 0.0
  %1417 = vmatpush2.msra.mxu0 0.0
  %1418 = vmatprep.subr.mxu0 0.0
  %1419 = vmatpush2.msra.mxu0 0.0
  %1420 = vmatprep.subr.mxu0 0.0
  %1421 = vmatpush2.msra.mxu0 0.0
  %1422 = vmatprep.subr.mxu0 0.0
  %1423 = vmatpush2.msra.mxu0 0.0
  %1424 = vmatprep.subr.mxu0 0.0
  %1425 = vmatpush2.msra.mxu0 0.0
  %1426 = vmatprep.subr.mxu0 0.0
  %1427 = vmatpush2.msra.mxu0 0.0
  %1428 = vmatprep.subr.mxu0 0.0
  %1429 = vmatpush2.msra.mxu0 0.0
  %1430 = vmatprep.subr.mxu0 0.0
  %1431 = vmatpush2.msra.mxu0 0.0
  %1432 = vmatprep.subr.mxu0 0.0
  %1433 = vmatpush2.msra.mxu0 0.0
  %1434 = vmatprep.mubr.f32.mxu0 0.0
  %1435 = vmatmul.mubr.f32.gmra.mxu0 %v1297
  %v1436 = vpop.f32.mrf.mxu0
  %v1437 = vadd.f32 %v1294, %v1436
  %v1438 = vpop.f32.mrf.mxu0
  %v1439 = vadd.f32 %v1294, %v1438
  %1440 = vdwg.mxu0
  %v1441 = vmax.f32 %v1366, 0.0
  %v1442 = vmax.f32 %v1368, 0.0
  %v1443 = vmax.f32 %v1437, 0.0
  %v1444 = vmax.f32 %v1439, 0.0
  %v1445 = vld [vmem:[%s7] sm:$0xff]
  %v1446 = vld [vmem:[%s7 + $0x8] sm:$0xff]
  %v1447 = vld [vmem:[%s7 + $0x10] sm:$0xff]
  %v1448 = vld [vmem:[%s7 + $0x18] sm:$0xff]
  %v1449 = vld [vmem:[%s7 + $0x20] sm:$0xff]
  %v1450 = vld [vmem:[%s7 + $0x28] sm:$0xff]
  %v1451 = vld [vmem:[%s7 + $0x30] sm:$0xff]
  %v1452 = vld [vmem:[%s7 + $0x38] sm:$0xff]
  %v1453 = vld [vmem:[%s7 + $0x40] sm:$0xff]
  %v1454 = vld [vmem:[%s7 + $0x48] sm:$0xff]
  %v1455 = vld [vmem:[%s7 + $0x50] sm:$0xff]
  %v1456 = vld [vmem:[%s7 + $0x58] sm:$0xff]
  %v1457 = vld [vmem:[%s7 + $0x60] sm:$0xff]
  %v1458 = vld [vmem:[%s7 + $0x68] sm:$0xff]
  %v1459 = vld [vmem:[%s7 + $0x70] sm:$0xff]
  %v1460 = vld [vmem:[%s7 + $0x78] sm:$0xff]
  %v1461 = vld [vmem:[%s7 + $0x80] sm:$0xff]
  %v1462 = vld [vmem:[%s7 + $0x88] sm:$0xff]
  %v1463 = vld [vmem:[%s7 + $0x90] sm:$0xff]
  %v1464 = vld [vmem:[%s7 + $0x98] sm:$0xff]
  %v1465 = vld [vmem:[%s7 + $0xa0] sm:$0xff]
  %v1466 = vld [vmem:[%s7 + $0xa8] sm:$0xff]
  %v1467 = vld [vmem:[%s7 + $0xb0] sm:$0xff]
  %v1468 = vld [vmem:[%s7 + $0xb8] sm:$0xff]
  %v1469 = vld [vmem:[%s7 + $0xc0] sm:$0xff]
  %v1470 = vld [vmem:[%s7 + $0xc8] sm:$0xff]
  %v1471 = vld [vmem:[%s7 + $0xd0] sm:$0xff]
  %v1472 = vld [vmem:[%s7 + $0xd8] sm:$0xff]
  %v1473 = vld [vmem:[%s7 + $0xe0] sm:$0xff]
  %v1474 = vld [vmem:[%s7 + $0xe8] sm:$0xff]
  %v1475 = vld [vmem:[%s7 + $0xf0] sm:$0xff]
  %v1476 = vld [vmem:[%s7 + $0xf8] sm:$0xff]
  %v1477 = vld [vmem:[%s7 + $0x100] sm:$0xff]
  %v1478 = vld [vmem:[%s7 + $0x108] sm:$0xff]
  %v1479 = vld [vmem:[%s7 + $0x110] sm:$0xff]
  %v1480 = vld [vmem:[%s7 + $0x118] sm:$0xff]
  %v1481 = vld [vmem:[%s7 + $0x120] sm:$0xff]
  %v1482 = vld [vmem:[%s7 + $0x128] sm:$0xff]
  %v1483 = vld [vmem:[%s7 + $0x130] sm:$0xff]
  %v1484 = vld [vmem:[%s7 + $0x138] sm:$0xff]
  %v1485 = vld [vmem:[%s7 + $0x140] sm:$0xff]
  %v1486 = vld [vmem:[%s7 + $0x148] sm:$0xff]
  %v1487 = vld [vmem:[%s7 + $0x150] sm:$0xff]
  %v1488 = vld [vmem:[%s7 + $0x158] sm:$0xff]
  %v1489 = vld [vmem:[%s7 + $0x160] sm:$0xff]
  %v1490 = vld [vmem:[%s7 + $0x168] sm:$0xff]
  %v1491 = vld [vmem:[%s7 + $0x170] sm:$0xff]
  %v1492 = vld [vmem:[%s7 + $0x178] sm:$0xff]
  %v1493 = vld [vmem:[%s7 + $0x180] sm:$0xff]
  %v1494 = vld [vmem:[%s7 + $0x188] sm:$0xff]
  %v1495 = vld [vmem:[%s7 + $0x190] sm:$0xff]
  %v1496 = vld [vmem:[%s7 + $0x198] sm:$0xff]
  %v1497 = vld [vmem:[%s7 + $0x1a0] sm:$0xff]
  %v1498 = vld [vmem:[%s7 + $0x1a8] sm:$0xff]
  %v1499 = vld [vmem:[%s7 + $0x1b0] sm:$0xff]
  %v1500 = vld [vmem:[%s7 + $0x1b8] sm:$0xff]
  %v1501 = vld [vmem:[%s7 + $0x1c0] sm:$0xff]
  %v1502 = vld [vmem:[%s7 + $0x1c8] sm:$0xff]
  %v1503 = vld [vmem:[%s7 + $0x1d0] sm:$0xff]
  %v1504 = vld [vmem:[%s7 + $0x1d8] sm:$0xff]
  %v1505 = vld [vmem:[%s7 + $0x1e0] sm:$0xff]
  %v1506 = vld [vmem:[%s7 + $0x1e8] sm:$0xff]
  %v1507 = vld [vmem:[%s7 + $0x1f0] sm:$0xff]
  %v1508 = vld [vmem:[%s7 + $0x1f8] sm:$0xff]
  %1509 = vmatprep.subr.mxu0 0.0
  %1510 = vmatpush1.msra.mxu0 %v1460
  %1511 = vmatprep.subr.mxu0 0.0
  %1512 = vmatpush1.msra.mxu0 %v1459
  %1513 = vmatprep.subr.mxu0 0.0
  %1514 = vmatpush1.msra.mxu0 %v1458
  %1515 = vmatprep.subr.mxu0 0.0
  %1516 = vmatpush1.msra.mxu0 %v1457
  %1517 = vmatprep.subr.mxu0 0.0
  %1518 = vmatpush1.msra.mxu0 %v1456
  %1519 = vmatprep.subr.mxu0 0.0
  %1520 = vmatpush1.msra.mxu0 %v1455
  %1521 = vmatprep.subr.mxu0 0.0
  %1522 = vmatpush1.msra.mxu0 %v1454
  %1523 = vmatprep.subr.mxu0 0.0
  %1524 = vmatpush1.msra.mxu0 %v1453
  %1525 = vmatprep.subr.mxu0 0.0
  %1526 = vmatpush1.msra.mxu0 %v1452
  %1527 = vmatprep.subr.mxu0 0.0
  %1528 = vmatpush1.msra.mxu0 %v1451
  %1529 = vmatprep.subr.mxu0 0.0
  %1530 = vmatpush1.msra.mxu0 %v1450
  %1531 = vmatprep.subr.mxu0 0.0
  %1532 = vmatpush1.msra.mxu0 %v1449
  %1533 = vmatprep.subr.mxu0 0.0
  %1534 = vmatpush1.msra.mxu0 %v1448
  %1535 = vmatprep.subr.mxu0 0.0
  %1536 = vmatpush1.msra.mxu0 %v1447
  %1537 = vmatprep.subr.mxu0 0.0
  %1538 = vmatpush1.msra.mxu0 %v1446
  %1539 = vmatprep.subr.mxu0 0.0
  %1540 = vmatpush1.msra.mxu0 %v1445
  %1541 = vmatprep.subr.mxu0 0.0
  %1542 = vmatpush2.msra.mxu0 %v1476
  %1543 = vmatprep.subr.mxu0 0.0
  %1544 = vmatpush2.msra.mxu0 %v1475
  %1545 = vmatprep.subr.mxu0 0.0
  %1546 = vmatpush2.msra.mxu0 %v1474
  %1547 = vmatprep.subr.mxu0 0.0
  %1548 = vmatpush2.msra.mxu0 %v1473
  %1549 = vmatprep.subr.mxu0 0.0
  %1550 = vmatpush2.msra.mxu0 %v1472
  %1551 = vmatprep.subr.mxu0 0.0
  %1552 = vmatpush2.msra.mxu0 %v1471
  %1553 = vmatprep.subr.mxu0 0.0
  %1554 = vmatpush2.msra.mxu0 %v1470
  %1555 = vmatprep.subr.mxu0 0.0
  %1556 = vmatpush2.msra.mxu0 %v1469
  %1557 = vmatprep.subr.mxu0 0.0
  %1558 = vmatpush2.msra.mxu0 %v1468
  %1559 = vmatprep.subr.mxu0 0.0
  %1560 = vmatpush2.msra.mxu0 %v1467
  %1561 = vmatprep.subr.mxu0 0.0
  %1562 = vmatpush2.msra.mxu0 %v1466
  %1563 = vmatprep.subr.mxu0 0.0
  %1564 = vmatpush2.msra.mxu0 %v1465
  %1565 = vmatprep.subr.mxu0 0.0
  %1566 = vmatpush2.msra.mxu0 %v1464
  %1567 = vmatprep.subr.mxu0 0.0
  %1568 = vmatpush2.msra.mxu0 %v1463
  %1569 = vmatprep.subr.mxu0 0.0
  %1570 = vmatpush2.msra.mxu0 %v1462
  %1571 = vmatprep.subr.mxu0 0.0
  %1572 = vmatpush2.msra.mxu0 %v1461
  %1573 = vmatprep.mubr.f32.mxu0 %v1442
  %1574 = vmatmul.mubr.f32.gmra.mxu0 %v1441
  %v1575 = vpop.f32.mrf.mxu0
  %v1576 = vadd.f32 0.0, %v1575
  %v1577 = vpop.f32.mrf.mxu0
  %1578 = vdwg.mxu0
  %1579 = vmatprep.subr.mxu0 0.0
  %1580 = vmatpush1.msra.mxu0 %v1492
  %1581 = vmatprep.subr.mxu0 0.0
  %1582 = vmatpush1.msra.mxu0 %v1491
  %1583 = vmatprep.subr.mxu0 0.0
  %1584 = vmatpush1.msra.mxu0 %v1490
  %1585 = vmatprep.subr.mxu0 0.0
  %1586 = vmatpush1.msra.mxu0 %v1489
  %1587 = vmatprep.subr.mxu0 0.0
  %1588 = vmatpush1.msra.mxu0 %v1488
  %1589 = vmatprep.subr.mxu0 0.0
  %1590 = vmatpush1.msra.mxu0 %v1487
  %1591 = vmatprep.subr.mxu0 0.0
  %1592 = vmatpush1.msra.mxu0 %v1486
  %1593 = vmatprep.subr.mxu0 0.0
  %1594 = vmatpush1.msra.mxu0 %v1485
  %1595 = vmatprep.subr.mxu0 0.0
  %1596 = vmatpush1.msra.mxu0 %v1484
  %1597 = vmatprep.subr.mxu0 0.0
  %1598 = vmatpush1.msra.mxu0 %v1483
  %1599 = vmatprep.subr.mxu0 0.0
  %1600 = vmatpush1.msra.mxu0 %v1482
  %1601 = vmatprep.subr.mxu0 0.0
  %1602 = vmatpush1.msra.mxu0 %v1481
  %1603 = vmatprep.subr.mxu0 0.0
  %1604 = vmatpush1.msra.mxu0 %v1480
  %1605 = vmatprep.subr.mxu0 0.0
  %1606 = vmatpush1.msra.mxu0 %v1479
  %1607 = vmatprep.subr.mxu0 0.0
  %1608 = vmatpush1.msra.mxu0 %v1478
  %1609 = vmatprep.subr.mxu0 0.0
  %1610 = vmatpush1.msra.mxu0 %v1477
  %1611 = vmatprep.subr.mxu0 0.0
  %1612 = vmatpush2.msra.mxu0 %v1508
  %1613 = vmatprep.subr.mxu0 0.0
  %1614 = vmatpush2.msra.mxu0 %v1507
  %1615 = vmatprep.subr.mxu0 0.0
  %1616 = vmatpush2.msra.mxu0 %v1506
  %1617 = vmatprep.subr.mxu0 0.0
  %1618 = vmatpush2.msra.mxu0 %v1505
  %1619 = vmatprep.subr.mxu0 0.0
  %1620 = vmatpush2.msra.mxu0 %v1504
  %1621 = vmatprep.subr.mxu0 0.0
  %1622 = vmatpush2.msra.mxu0 %v1503
  %1623 = vmatprep.subr.mxu0 0.0
  %1624 = vmatpush2.msra.mxu0 %v1502
  %1625 = vmatprep.subr.mxu0 0.0
  %1626 = vmatpush2.msra.mxu0 %v1501
  %1627 = vmatprep.subr.mxu0 0.0
  %1628 = vmatpush2.msra.mxu0 %v1500
  %1629 = vmatprep.subr.mxu0 0.0
  %1630 = vmatpush2.msra.mxu0 %v1499
  %1631 = vmatprep.subr.mxu0 0.0
  %1632 = vmatpush2.msra.mxu0 %v1498
  %1633 = vmatprep.subr.mxu0 0.0
  %1634 = vmatpush2.msra.mxu0 %v1497
  %1635 = vmatprep.subr.mxu0 0.0
  %1636 = vmatpush2.msra.mxu0 %v1496
  %1637 = vmatprep.subr.mxu0 0.0
  %1638 = vmatpush2.msra.mxu0 %v1495
  %1639 = vmatprep.subr.mxu0 0.0
  %1640 = vmatpush2.msra.mxu0 %v1494
  %1641 = vmatprep.subr.mxu0 0.0
  %1642 = vmatpush2.msra.mxu0 %v1493
  %1643 = vmatprep.mubr.f32.mxu0 %v1444
  %1644 = vmatmul.mubr.f32.gmra.mxu0 %v1443
  %v1645 = vpop.f32.mrf.mxu0
  %v1646 = vadd.f32 %v1576, %v1645
  %v1647 = vpop.f32.mrf.mxu0
  %1648 = vdwg.mxu0
  %vm1649 = vcmask 15360
  %1650 = vst.msk [vmem:[%s8] sm:$0xff] %vm1649, %v1646
  // Predicated region
  $region34: #{tpu_custom_call.1} parent=0 // pred_check
    _
  $region35: #{tpu_custom_call.1} parent=0 // pred_check_branch
    %1652 = sbr.rel (0) target = $region37
  $region36: #{tpu_custom_call.1} parent=0 // pred_region
    _
  $region37: #{tpu_custom_call.1} parent=0 // pred_fallthru
    _
  // Predicated region
  $region38: #{tpu_custom_call.1} parent=0 // pred_check
    _
  $region39: #{tpu_custom_call.1} parent=0 // pred_check_branch
    %1654 = sbr.rel (0) target = $region41
  $region40: #{tpu_custom_call.1} parent=0 // pred_region
    _
  $region41: #{tpu_custom_call.1} parent=0 // pred_fallthru
    _

</llo_original>
